<compile_context>
chip_gen: v6e
topology: v6e:2x2x1
jax: 0.10.0
libtpu: 0.0.40
codegen_flags: <defaults>
</compile_context>

<pallas_src>
import jax
import jax.numpy as jnp
from jax import lax
from jax.experimental import pallas as pl
from jax.experimental.pallas import tpu as pltpu


# ----------------------------------------------------------------------------
# Fused kernel: [LSTM layer]*num_layers (wavefront) -> last step -> Linear
# ----------------------------------------------------------------------------
def _make_fused_lstm_fc_kernel(num_layers, T, Bp, H):
    def kernel(x_ref, *rest):
        # rest = [w_ih_0, w_hh_0, b_0, ..., w_ih_{L-1}, w_hh_{L-1}, b_{L-1},
        #         fc_w_ref, fc_b_ref, out_ref]
        layer_refs = rest[: 3 * num_layers]
        fc_w_ref, fc_b_ref, out_ref = rest[3 * num_layers:]

        # Load weights once (bf16) and hoist bias broadcasts out of the t-loop.
        w_ih = [layer_refs[3 * l][...] for l in range(num_layers)]        # (D_l, 4H) bf16
        w_hh = [layer_refs[3 * l + 1][...] for l in range(num_layers)]    # (H, 4H)   bf16
        b_raw = [layer_refs[3 * l + 2][...] for l in range(num_layers)]   # (1, 4H)   f32
        b_bcast = [jnp.broadcast_to(b_raw[l], (Bp, 4 * H))
                   for l in range(1, num_layers)]                         # hoisted, used T times

        # Hoisted layer-0 input projection for the whole sequence:
        # one big (T*Bp, D) @ (D, 4H) MXU matmul, bias folded in here.
        zx0 = jnp.dot(x_ref[...], w_ih[0],
                      preferred_element_type=jnp.float32) + b_raw[0]      # (T*Bp, 4H) f32

        h = [jnp.zeros((Bp, H), jnp.float32) for _ in range(num_layers)]  # init_hidden() => 0
        c = [jnp.zeros((Bp, H), jnp.float32) for _ in range(num_layers)]

        def cell(gates, c_prev):
            # Two full 128-lane EUP pushes instead of four 32-lane ones.
            sig = jax.nn.sigmoid(gates)                                   # (Bp, 4H)
            tnh = jnp.tanh(gates)                                         # (Bp, 4H)
            i = sig[:, 0 * H:1 * H]
            f = sig[:, 1 * H:2 * H]
            g = tnh[:, 2 * H:3 * H]
            o = sig[:, 3 * H:4 * H]
            c_new = f * c_prev + i * g
            h_new = o * jnp.tanh(c_new)
            return h_new, c_new

        # Fully unrolled wavefront: at step t, layer l consumes h_{l-1,t}
        # immediately; layer-(l) step t and layer-(l-1) step t+1 are
        # independent, so the LLO scheduler can overlap their matmul/EUP work.
        for t in range(T):
            # Layer 0: recurrent matmul + precomputed, sublane-aligned zx rows.
            gates0 = jnp.dot(h[0].astype(jnp.bfloat16), w_hh[0],
                             preferred_element_type=jnp.float32) \
                     + zx0[t * Bp:(t + 1) * Bp]
            h[0], c[0] = cell(gates0, c[0])

            # Deeper layers: per-step input projection off the recurrence chain.
            for l in range(1, num_layers):
                zx_l = jnp.dot(h[l - 1].astype(jnp.bfloat16), w_ih[l],
                               preferred_element_type=jnp.float32) + b_bcast[l - 1]
                gates = jnp.dot(h[l].astype(jnp.bfloat16), w_hh[l],
                                preferred_element_type=jnp.float32) + zx_l
                h[l], c[l] = cell(gates, c[l])

        # Final Linear(hidden_size -> out_dim) fused into the same kernel.
        out_ref[...] = (jnp.dot(h[num_layers - 1].astype(jnp.bfloat16), fc_w_ref[...],
                                preferred_element_type=jnp.float32)
                        + fc_b_ref[...])

    return kernel


# ----------------------------------------------------------------------------
# Wrapper
# ----------------------------------------------------------------------------
@jax.jit
def lstm_fc_forward(x_btd, params):
    """Matches lSTM.forward: lstm(batch_first) -> output[:, -1, :] -> fc_single."""
    B, T, D = x_btd.shape
    layers = params["layers"]
    num_layers = len(layers)
    H = layers[0][1].shape[0]                      # w_hh: (H, 4H)
    out_dim = params["fc_w_t"].shape[-1]

    # Pad batch to the f32 sublane granule; padded rows computed & discarded.
    Bp = max(8, ((B + 7) // 8) * 8)
    x_pad = jnp.zeros((Bp, T, D), jnp.float32).at[:B].set(x_btd.astype(jnp.float32))
    # One-time reorder to time-major rows (t*Bp + b); bf16 for the MXU operand.
    x_tm = jnp.transpose(x_pad, (1, 0, 2)).reshape(T * Bp, D).astype(jnp.bfloat16)

    flat_inputs = [x_tm]
    for (w_ih, w_hh, b) in layers:
        flat_inputs += [w_ih, w_hh, b]
    flat_inputs += [params["fc_w_t"], params["fc_b"]]

    vmem = pl.BlockSpec(memory_space=pltpu.MemorySpace.VMEM)
    kernel = _make_fused_lstm_fc_kernel(num_layers, T, Bp, H)
    out_p = pl.pallas_call(
        kernel,
        out_shape=jax.ShapeDtypeStruct((Bp, out_dim), jnp.float32),
        in_specs=[vmem] * len(flat_inputs),
        out_specs=vmem,
    )(*flat_inputs)
    return out_p[:B]


# ----------------------------------------------------------------------------
# Deterministic parameter init (PyTorch-default-style uniform ranges),
# gates pre-packed along the 4H axis in (i, f, g, o) order.
# Matmul weights stored in bf16; biases kept in f32 (summed b_ih + b_hh).
# ----------------------------------------------------------------------------
def init_params(key, input_size, hidden_size, num_layers, out_dim=20):
    params = {"layers": []}
    bound = hidden_size ** -0.5
    for layer in range(num_layers):
        d_in = input_size if layer == 0 else hidden_size
        key, k1, k2, k3, k4 = jax.random.split(key, 5)
        w_ih = jax.random.uniform(k1, (d_in, 4 * hidden_size),
                                  jnp.float32, -bound, bound).astype(jnp.bfloat16)
        w_hh = jax.random.uniform(k2, (hidden_size, 4 * hidden_size),
                                  jnp.float32, -bound, bound).astype(jnp.bfloat16)
        b_ih = jax.random.uniform(k3, (1, 4 * hidden_size),
                                  jnp.float32, -bound, bound)
        b_hh = jax.random.uniform(k4, (1, 4 * hidden_size),
                                  jnp.float32, -bound, bound)
        params["layers"].append((w_ih, w_hh, b_ih + b_hh))
    key, k5, k6 = jax.random.split(key, 3)
    # fc weight stored pre-transposed: (hidden_size, out_dim)
    params["fc_w_t"] = jax.random.uniform(k5, (hidden_size, out_dim),
                                          jnp.float32, -bound, bound).astype(jnp.bfloat16)
    params["fc_b"] = jax.random.uniform(k6, (1, out_dim),
                                        jnp.float32, -bound, bound)
    return params


# ----------------------------------------------------------------------------
# Pure-JAX reference (same math, same bf16-operand / f32-accumulate precision)
# ----------------------------------------------------------------------------
def lstm_fc_forward_ref(x_btd, params):
    B, T, _ = x_btd.shape
    seq = x_btd.astype(jnp.float32)                       # (B, T, D)
    for (w_ih, w_hh, b) in params["layers"]:
        H = w_hh.shape[0]

        def step(carry, x_t):
            h, c = carry
            z = (jnp.dot(x_t.astype(jnp.bfloat16), w_ih,
                         preferred_element_type=jnp.float32)
                 + jnp.dot(h.astype(jnp.bfloat16), w_hh,
                           preferred_element_type=jnp.float32)
                 + b)                                     # (B, 4H) f32
            i = jax.nn.sigmoid(z[:, 0:H])
            f = jax.nn.sigmoid(z[:, H:2 * H])
            g = jnp.tanh(z[:, 2 * H:3 * H])
            o = jax.nn.sigmoid(z[:, 3 * H:4 * H])
            c = f * c + i * g
            h = o * jnp.tanh(c)
            return (h, c), h

        h0 = jnp.zeros((B, H), jnp.float32)
        c0 = jnp.zeros((B, H), jnp.float32)
        _, ys = lax.scan(step, (h0, c0), jnp.transpose(seq, (1, 0, 2)))
        seq = jnp.transpose(ys, (1, 0, 2))
    h_last = seq[:, -1, :]
    return (jnp.dot(h_last.astype(jnp.bfloat16), params["fc_w_t"],
                    preferred_element_type=jnp.float32)
            + params["fc_b"])


# ----------------------------------------------------------------------------
if __name__ == "__main__":
    B, T, INPUT_SIZE, HIDDEN, LAYERS = 4, 8, 16, 32, 2

    key = jax.random.PRNGKey(0)
    key, kx, kp = jax.random.split(key, 3)
    x = jax.random.normal(kx, (B, T, INPUT_SIZE), jnp.float32)
    params = init_params(kp, INPUT_SIZE, HIDDEN, LAYERS, out_dim=20)

    out = jax.block_until_ready(lstm_fc_forward(x, params))
    assert out.shape == (B, 20), out.shape

    ref = jax.block_until_ready(lstm_fc_forward_ref(x, params))
    assert jnp.allclose(out, ref, atol=1e-2, rtol=1e-2), \
        float(jnp.max(jnp.abs(out - ref)))

    print("KERNEL_OK")
</pallas_src>

<mosaic_0001>
module attributes {stable_mosaic.version = 11 : i64} {
  func.func @kernel(%arg0: memref<64x16xbf16, #tpu.memory_space<vmem>>, %arg1: memref<16x128xbf16, #tpu.memory_space<vmem>>, %arg2: memref<32x128xbf16, #tpu.memory_space<vmem>>, %arg3: memref<1x128xf32, #tpu.memory_space<vmem>>, %arg4: memref<32x128xbf16, #tpu.memory_space<vmem>>, %arg5: memref<32x128xbf16, #tpu.memory_space<vmem>>, %arg6: memref<1x128xf32, #tpu.memory_space<vmem>>, %arg7: memref<32x20xbf16, #tpu.memory_space<vmem>>, %arg8: memref<1x20xf32, #tpu.memory_space<vmem>>, %arg9: memref<8x20xf32, #tpu.memory_space<vmem>>) attributes {dimension_semantics = [], scalar_prefetch = 0 : i64, scratch_operands = 0 : i64, tpu.core_type = #tpu.core_type<tc>} {
    %c0 = arith.constant 0 : index
    %c0_0 = arith.constant 0 : index
    %0 = vector.load %arg1[%c0, %c0_0] : memref<16x128xbf16, #tpu.memory_space<vmem>>, vector<16x128xbf16>
    %c0_1 = arith.constant 0 : index
    %c0_2 = arith.constant 0 : index
    %1 = vector.load %arg4[%c0_1, %c0_2] : memref<32x128xbf16, #tpu.memory_space<vmem>>, vector<32x128xbf16>
    %c0_3 = arith.constant 0 : index
    %c0_4 = arith.constant 0 : index
    %2 = vector.load %arg2[%c0_3, %c0_4] : memref<32x128xbf16, #tpu.memory_space<vmem>>, vector<32x128xbf16>
    %c0_5 = arith.constant 0 : index
    %c0_6 = arith.constant 0 : index
    %3 = vector.load %arg5[%c0_5, %c0_6] : memref<32x128xbf16, #tpu.memory_space<vmem>>, vector<32x128xbf16>
    %c0_7 = arith.constant 0 : index
    %c0_8 = arith.constant 0 : index
    %4 = vector.load %arg3[%c0_7, %c0_8] : memref<1x128xf32, #tpu.memory_space<vmem>>, vector<1x128xf32>
    %c0_9 = arith.constant 0 : index
    %c0_10 = arith.constant 0 : index
    %5 = vector.load %arg6[%c0_9, %c0_10] : memref<1x128xf32, #tpu.memory_space<vmem>>, vector<1x128xf32>
    %6 = vector.shape_cast %5 : vector<1x128xf32> to vector<1x128xf32>
    %7 = vector.broadcast %6 : vector<1x128xf32> to vector<8x128xf32>
    %c0_11 = arith.constant 0 : index
    %c0_12 = arith.constant 0 : index
    %8 = vector.load %arg0[%c0_11, %c0_12] : memref<64x16xbf16, #tpu.memory_space<vmem>>, vector<64x16xbf16>
    %cst = arith.constant dense<0.000000e+00> : vector<64x128xf32>
    %9 = tpu.matmul %8, %0, %cst {dimension_numbers = #tpu.dot_dimension_numbers<[1], [0], [0], [1], [0, 0, 1, 1], [], []>} : vector<64x16xbf16>, vector<16x128xbf16>, vector<64x128xf32> -> vector<64x128xf32>
    %10 = vector.broadcast %4 : vector<1x128xf32> to vector<64x128xf32>
    %11 = arith.addf %9, %10 : vector<64x128xf32>
    %cst_13 = arith.constant 0.000000e+00 : f32
    %12 = vector.broadcast %cst_13 : f32 to vector<8x32xf32>
    %cst_14 = arith.constant 0.000000e+00 : f32
    %13 = vector.broadcast %cst_14 : f32 to vector<8x32xf32>
    %cst_15 = arith.constant 0.000000e+00 : f32
    %14 = vector.broadcast %cst_15 : f32 to vector<8x32xf32>
    %cst_16 = arith.constant 0.000000e+00 : f32
    %15 = vector.broadcast %cst_16 : f32 to vector<8x32xf32>
    %16 = arith.truncf %12 : vector<8x32xf32> to vector<8x32xbf16>
    %cst_17 = arith.constant dense<0.000000e+00> : vector<8x128xf32>
    %17 = tpu.matmul %16, %2, %cst_17 {dimension_numbers = #tpu.dot_dimension_numbers<[1], [0], [0], [1], [0, 0, 1, 1], [], []>} : vector<8x32xbf16>, vector<32x128xbf16>, vector<8x128xf32> -> vector<8x128xf32>
    %18 = vector.extract_strided_slice %11 {offsets = [0, 0], sizes = [8, 128], strides = [1, 1]} : vector<64x128xf32> to vector<8x128xf32>
    %19 = arith.addf %17, %18 : vector<8x128xf32>
    %20 = arith.negf %19 : vector<8x128xf32>
    %21 = math.exp %20 : vector<8x128xf32>
    %cst_18 = arith.constant 1.000000e+00 : f32
    %22 = vector.broadcast %cst_18 : f32 to vector<8x128xf32>
    %23 = arith.addf %22, %21 : vector<8x128xf32>
    %24 = arith.divf %22, %23 : vector<8x128xf32>
    %25 = math.tanh %19 : vector<8x128xf32>
    %26 = vector.extract_strided_slice %24 {offsets = [0, 0], sizes = [8, 32], strides = [1, 1]} : vector<8x128xf32> to vector<8x32xf32>
    %27 = vector.extract_strided_slice %24 {offsets = [0, 32], sizes = [8, 32], strides = [1, 1]} : vector<8x128xf32> to vector<8x32xf32>
    %28 = vector.extract_strided_slice %25 {offsets = [0, 64], sizes = [8, 32], strides = [1, 1]} : vector<8x128xf32> to vector<8x32xf32>
    %29 = vector.extract_strided_slice %24 {offsets = [0, 96], sizes = [8, 32], strides = [1, 1]} : vector<8x128xf32> to vector<8x32xf32>
    %30 = arith.mulf %27, %14 : vector<8x32xf32>
    %31 = arith.mulf %26, %28 : vector<8x32xf32>
    %32 = arith.addf %30, %31 : vector<8x32xf32>
    %33 = math.tanh %32 : vector<8x32xf32>
    %34 = arith.mulf %29, %33 : vector<8x32xf32>
    %35 = arith.truncf %34 : vector<8x32xf32> to vector<8x32xbf16>
    %cst_19 = arith.constant dense<0.000000e+00> : vector<8x128xf32>
    %36 = tpu.matmul %35, %1, %cst_19 {dimension_numbers = #tpu.dot_dimension_numbers<[1], [0], [0], [1], [0, 0, 1, 1], [], []>} : vector<8x32xbf16>, vector<32x128xbf16>, vector<8x128xf32> -> vector<8x128xf32>
    %37 = arith.addf %36, %7 : vector<8x128xf32>
    %38 = arith.truncf %13 : vector<8x32xf32> to vector<8x32xbf16>
    %cst_20 = arith.constant dense<0.000000e+00> : vector<8x128xf32>
    %39 = tpu.matmul %38, %3, %cst_20 {dimension_numbers = #tpu.dot_dimension_numbers<[1], [0], [0], [1], [0, 0, 1, 1], [], []>} : vector<8x32xbf16>, vector<32x128xbf16>, vector<8x128xf32> -> vector<8x128xf32>
    %40 = arith.addf %39, %37 : vector<8x128xf32>
    %41 = arith.negf %40 : vector<8x128xf32>
    %42 = math.exp %41 : vector<8x128xf32>
    %cst_21 = arith.constant 1.000000e+00 : f32
    %43 = vector.broadcast %cst_21 : f32 to vector<8x128xf32>
    %44 = arith.addf %43, %42 : vector<8x128xf32>
    %45 = arith.divf %43, %44 : vector<8x128xf32>
    %46 = math.tanh %40 : vector<8x128xf32>
    %47 = vector.extract_strided_slice %45 {offsets = [0, 0], sizes = [8, 32], strides = [1, 1]} : vector<8x128xf32> to vector<8x32xf32>
    %48 = vector.extract_strided_slice %45 {offsets = [0, 32], sizes = [8, 32], strides = [1, 1]} : vector<8x128xf32> to vector<8x32xf32>
    %49 = vector.extract_strided_slice %46 {offsets = [0, 64], sizes = [8, 32], strides = [1, 1]} : vector<8x128xf32> to vector<8x32xf32>
    %50 = vector.extract_strided_slice %45 {offsets = [0, 96], sizes = [8, 32], strides = [1, 1]} : vector<8x128xf32> to vector<8x32xf32>
    %51 = arith.mulf %48, %15 : vector<8x32xf32>
    %52 = arith.mulf %47, %49 : vector<8x32xf32>
    %53 = arith.addf %51, %52 : vector<8x32xf32>
    %54 = math.tanh %53 : vector<8x32xf32>
    %55 = arith.mulf %50, %54 : vector<8x32xf32>
    %56 = arith.truncf %34 : vector<8x32xf32> to vector<8x32xbf16>
    %cst_22 = arith.constant dense<0.000000e+00> : vector<8x128xf32>
    %57 = tpu.matmul %56, %2, %cst_22 {dimension_numbers = #tpu.dot_dimension_numbers<[1], [0], [0], [1], [0, 0, 1, 1], [], []>} : vector<8x32xbf16>, vector<32x128xbf16>, vector<8x128xf32> -> vector<8x128xf32>
    %58 = vector.extract_strided_slice %11 {offsets = [8, 0], sizes = [8, 128], strides = [1, 1]} : vector<64x128xf32> to vector<8x128xf32>
    %59 = arith.addf %57, %58 : vector<8x128xf32>
    %60 = arith.negf %59 : vector<8x128xf32>
    %61 = math.exp %60 : vector<8x128xf32>
    %cst_23 = arith.constant 1.000000e+00 : f32
    %62 = vector.broadcast %cst_23 : f32 to vector<8x128xf32>
    %63 = arith.addf %62, %61 : vector<8x128xf32>
    %64 = arith.divf %62, %63 : vector<8x128xf32>
    %65 = math.tanh %59 : vector<8x128xf32>
    %66 = vector.extract_strided_slice %64 {offsets = [0, 0], sizes = [8, 32], strides = [1, 1]} : vector<8x128xf32> to vector<8x32xf32>
    %67 = vector.extract_strided_slice %64 {offsets = [0, 32], sizes = [8, 32], strides = [1, 1]} : vector<8x128xf32> to vector<8x32xf32>
    %68 = vector.extract_strided_slice %65 {offsets = [0, 64], sizes = [8, 32], strides = [1, 1]} : vector<8x128xf32> to vector<8x32xf32>
    %69 = vector.extract_strided_slice %64 {offsets = [0, 96], sizes = [8, 32], strides = [1, 1]} : vector<8x128xf32> to vector<8x32xf32>
    %70 = arith.mulf %67, %32 : vector<8x32xf32>
    %71 = arith.mulf %66, %68 : vector<8x32xf32>
    %72 = arith.addf %70, %71 : vector<8x32xf32>
    %73 = math.tanh %72 : vector<8x32xf32>
    %74 = arith.mulf %69, %73 : vector<8x32xf32>
    %75 = arith.truncf %74 : vector<8x32xf32> to vector<8x32xbf16>
    %cst_24 = arith.constant dense<0.000000e+00> : vector<8x128xf32>
    %76 = tpu.matmul %75, %1, %cst_24 {dimension_numbers = #tpu.dot_dimension_numbers<[1], [0], [0], [1], [0, 0, 1, 1], [], []>} : vector<8x32xbf16>, vector<32x128xbf16>, vector<8x128xf32> -> vector<8x128xf32>
    %77 = arith.addf %76, %7 : vector<8x128xf32>
    %78 = arith.truncf %55 : vector<8x32xf32> to vector<8x32xbf16>
    %cst_25 = arith.constant dense<0.000000e+00> : vector<8x128xf32>
    %79 = tpu.matmul %78, %3, %cst_25 {dimension_numbers = #tpu.dot_dimension_numbers<[1], [0], [0], [1], [0, 0, 1, 1], [], []>} : vector<8x32xbf16>, vector<32x128xbf16>, vector<8x128xf32> -> vector<8x128xf32>
    %80 = arith.addf %79, %77 : vector<8x128xf32>
    %81 = arith.negf %80 : vector<8x128xf32>
    %82 = math.exp %81 : vector<8x128xf32>
    %cst_26 = arith.constant 1.000000e+00 : f32
    %83 = vector.broadcast %cst_26 : f32 to vector<8x128xf32>
    %84 = arith.addf %83, %82 : vector<8x128xf32>
    %85 = arith.divf %83, %84 : vector<8x128xf32>
    %86 = math.tanh %80 : vector<8x128xf32>
    %87 = vector.extract_strided_slice %85 {offsets = [0, 0], sizes = [8, 32], strides = [1, 1]} : vector<8x128xf32> to vector<8x32xf32>
    %88 = vector.extract_strided_slice %85 {offsets = [0, 32], sizes = [8, 32], strides = [1, 1]} : vector<8x128xf32> to vector<8x32xf32>
    %89 = vector.extract_strided_slice %86 {offsets = [0, 64], sizes = [8, 32], strides = [1, 1]} : vector<8x128xf32> to vector<8x32xf32>
    %90 = vector.extract_strided_slice %85 {offsets = [0, 96], sizes = [8, 32], strides = [1, 1]} : vector<8x128xf32> to vector<8x32xf32>
    %91 = arith.mulf %88, %53 : vector<8x32xf32>
    %92 = arith.mulf %87, %89 : vector<8x32xf32>
    %93 = arith.addf %91, %92 : vector<8x32xf32>
    %94 = math.tanh %93 : vector<8x32xf32>
    %95 = arith.mulf %90, %94 : vector<8x32xf32>
    %96 = arith.truncf %74 : vector<8x32xf32> to vector<8x32xbf16>
    %cst_27 = arith.constant dense<0.000000e+00> : vector<8x128xf32>
    %97 = tpu.matmul %96, %2, %cst_27 {dimension_numbers = #tpu.dot_dimension_numbers<[1], [0], [0], [1], [0, 0, 1, 1], [], []>} : vector<8x32xbf16>, vector<32x128xbf16>, vector<8x128xf32> -> vector<8x128xf32>
    %98 = vector.extract_strided_slice %11 {offsets = [16, 0], sizes = [8, 128], strides = [1, 1]} : vector<64x128xf32> to vector<8x128xf32>
    %99 = arith.addf %97, %98 : vector<8x128xf32>
    %100 = arith.negf %99 : vector<8x128xf32>
    %101 = math.exp %100 : vector<8x128xf32>
    %cst_28 = arith.constant 1.000000e+00 : f32
    %102 = vector.broadcast %cst_28 : f32 to vector<8x128xf32>
    %103 = arith.addf %102, %101 : vector<8x128xf32>
    %104 = arith.divf %102, %103 : vector<8x128xf32>
    %105 = math.tanh %99 : vector<8x128xf32>
    %106 = vector.extract_strided_slice %104 {offsets = [0, 0], sizes = [8, 32], strides = [1, 1]} : vector<8x128xf32> to vector<8x32xf32>
    %107 = vector.extract_strided_slice %104 {offsets = [0, 32], sizes = [8, 32], strides = [1, 1]} : vector<8x128xf32> to vector<8x32xf32>
    %108 = vector.extract_strided_slice %105 {offsets = [0, 64], sizes = [8, 32], strides = [1, 1]} : vector<8x128xf32> to vector<8x32xf32>
    %109 = vector.extract_strided_slice %104 {offsets = [0, 96], sizes = [8, 32], strides = [1, 1]} : vector<8x128xf32> to vector<8x32xf32>
    %110 = arith.mulf %107, %72 : vector<8x32xf32>
    %111 = arith.mulf %106, %108 : vector<8x32xf32>
    %112 = arith.addf %110, %111 : vector<8x32xf32>
    %113 = math.tanh %112 : vector<8x32xf32>
    %114 = arith.mulf %109, %113 : vector<8x32xf32>
    %115 = arith.truncf %114 : vector<8x32xf32> to vector<8x32xbf16>
    %cst_29 = arith.constant dense<0.000000e+00> : vector<8x128xf32>
    %116 = tpu.matmul %115, %1, %cst_29 {dimension_numbers = #tpu.dot_dimension_numbers<[1], [0], [0], [1], [0, 0, 1, 1], [], []>} : vector<8x32xbf16>, vector<32x128xbf16>, vector<8x128xf32> -> vector<8x128xf32>
    %117 = arith.addf %116, %7 : vector<8x128xf32>
    %118 = arith.truncf %95 : vector<8x32xf32> to vector<8x32xbf16>
    %cst_30 = arith.constant dense<0.000000e+00> : vector<8x128xf32>
    %119 = tpu.matmul %118, %3, %cst_30 {dimension_numbers = #tpu.dot_dimension_numbers<[1], [0], [0], [1], [0, 0, 1, 1], [], []>} : vector<8x32xbf16>, vector<32x128xbf16>, vector<8x128xf32> -> vector<8x128xf32>
    %120 = arith.addf %119, %117 : vector<8x128xf32>
    %121 = arith.negf %120 : vector<8x128xf32>
    %122 = math.exp %121 : vector<8x128xf32>
    %cst_31 = arith.constant 1.000000e+00 : f32
    %123 = vector.broadcast %cst_31 : f32 to vector<8x128xf32>
    %124 = arith.addf %123, %122 : vector<8x128xf32>
    %125 = arith.divf %123, %124 : vector<8x128xf32>
    %126 = math.tanh %120 : vector<8x128xf32>
    %127 = vector.extract_strided_slice %125 {offsets = [0, 0], sizes = [8, 32], strides = [1, 1]} : vector<8x128xf32> to vector<8x32xf32>
    %128 = vector.extract_strided_slice %125 {offsets = [0, 32], sizes = [8, 32], strides = [1, 1]} : vector<8x128xf32> to vector<8x32xf32>
    %129 = vector.extract_strided_slice %126 {offsets = [0, 64], sizes = [8, 32], strides = [1, 1]} : vector<8x128xf32> to vector<8x32xf32>
    %130 = vector.extract_strided_slice %125 {offsets = [0, 96], sizes = [8, 32], strides = [1, 1]} : vector<8x128xf32> to vector<8x32xf32>
    %131 = arith.mulf %128, %93 : vector<8x32xf32>
    %132 = arith.mulf %127, %129 : vector<8x32xf32>
    %133 = arith.addf %131, %132 : vector<8x32xf32>
    %134 = math.tanh %133 : vector<8x32xf32>
    %135 = arith.mulf %130, %134 : vector<8x32xf32>
    %136 = arith.truncf %114 : vector<8x32xf32> to vector<8x32xbf16>
    %cst_32 = arith.constant dense<0.000000e+00> : vector<8x128xf32>
    %137 = tpu.matmul %136, %2, %cst_32 {dimension_numbers = #tpu.dot_dimension_numbers<[1], [0], [0], [1], [0, 0, 1, 1], [], []>} : vector<8x32xbf16>, vector<32x128xbf16>, vector<8x128xf32> -> vector<8x128xf32>
    %138 = vector.extract_strided_slice %11 {offsets = [24, 0], sizes = [8, 128], strides = [1, 1]} : vector<64x128xf32> to vector<8x128xf32>
    %139 = arith.addf %137, %138 : vector<8x128xf32>
    %140 = arith.negf %139 : vector<8x128xf32>
    %141 = math.exp %140 : vector<8x128xf32>
    %cst_33 = arith.constant 1.000000e+00 : f32
    %142 = vector.broadcast %cst_33 : f32 to vector<8x128xf32>
    %143 = arith.addf %142, %141 : vector<8x128xf32>
    %144 = arith.divf %142, %143 : vector<8x128xf32>
    %145 = math.tanh %139 : vector<8x128xf32>
    %146 = vector.extract_strided_slice %144 {offsets = [0, 0], sizes = [8, 32], strides = [1, 1]} : vector<8x128xf32> to vector<8x32xf32>
    %147 = vector.extract_strided_slice %144 {offsets = [0, 32], sizes = [8, 32], strides = [1, 1]} : vector<8x128xf32> to vector<8x32xf32>
    %148 = vector.extract_strided_slice %145 {offsets = [0, 64], sizes = [8, 32], strides = [1, 1]} : vector<8x128xf32> to vector<8x32xf32>
    %149 = vector.extract_strided_slice %144 {offsets = [0, 96], sizes = [8, 32], strides = [1, 1]} : vector<8x128xf32> to vector<8x32xf32>
    %150 = arith.mulf %147, %112 : vector<8x32xf32>
    %151 = arith.mulf %146, %148 : vector<8x32xf32>
    %152 = arith.addf %150, %151 : vector<8x32xf32>
    %153 = math.tanh %152 : vector<8x32xf32>
    %154 = arith.mulf %149, %153 : vector<8x32xf32>
    %155 = arith.truncf %154 : vector<8x32xf32> to vector<8x32xbf16>
    %cst_34 = arith.constant dense<0.000000e+00> : vector<8x128xf32>
    %156 = tpu.matmul %155, %1, %cst_34 {dimension_numbers = #tpu.dot_dimension_numbers<[1], [0], [0], [1], [0, 0, 1, 1], [], []>} : vector<8x32xbf16>, vector<32x128xbf16>, vector<8x128xf32> -> vector<8x128xf32>
    %157 = arith.addf %156, %7 : vector<8x128xf32>
    %158 = arith.truncf %135 : vector<8x32xf32> to vector<8x32xbf16>
    %cst_35 = arith.constant dense<0.000000e+00> : vector<8x128xf32>
    %159 = tpu.matmul %158, %3, %cst_35 {dimension_numbers = #tpu.dot_dimension_numbers<[1], [0], [0], [1], [0, 0, 1, 1], [], []>} : vector<8x32xbf16>, vector<32x128xbf16>, vector<8x128xf32> -> vector<8x128xf32>
    %160 = arith.addf %159, %157 : vector<8x128xf32>
    %161 = arith.negf %160 : vector<8x128xf32>
    %162 = math.exp %161 : vector<8x128xf32>
    %cst_36 = arith.constant 1.000000e+00 : f32
    %163 = vector.broadcast %cst_36 : f32 to vector<8x128xf32>
    %164 = arith.addf %163, %162 : vector<8x128xf32>
    %165 = arith.divf %163, %164 : vector<8x128xf32>
    %166 = math.tanh %160 : vector<8x128xf32>
    %167 = vector.extract_strided_slice %165 {offsets = [0, 0], sizes = [8, 32], strides = [1, 1]} : vector<8x128xf32> to vector<8x32xf32>
    %168 = vector.extract_strided_slice %165 {offsets = [0, 32], sizes = [8, 32], strides = [1, 1]} : vector<8x128xf32> to vector<8x32xf32>
    %169 = vector.extract_strided_slice %166 {offsets = [0, 64], sizes = [8, 32], strides = [1, 1]} : vector<8x128xf32> to vector<8x32xf32>
    %170 = vector.extract_strided_slice %165 {offsets = [0, 96], sizes = [8, 32], strides = [1, 1]} : vector<8x128xf32> to vector<8x32xf32>
    %171 = arith.mulf %168, %133 : vector<8x32xf32>
    %172 = arith.mulf %167, %169 : vector<8x32xf32>
    %173 = arith.addf %171, %172 : vector<8x32xf32>
    %174 = math.tanh %173 : vector<8x32xf32>
    %175 = arith.mulf %170, %174 : vector<8x32xf32>
    %176 = arith.truncf %154 : vector<8x32xf32> to vector<8x32xbf16>
    %cst_37 = arith.constant dense<0.000000e+00> : vector<8x128xf32>
    %177 = tpu.matmul %176, %2, %cst_37 {dimension_numbers = #tpu.dot_dimension_numbers<[1], [0], [0], [1], [0, 0, 1, 1], [], []>} : vector<8x32xbf16>, vector<32x128xbf16>, vector<8x128xf32> -> vector<8x128xf32>
    %178 = vector.extract_strided_slice %11 {offsets = [32, 0], sizes = [8, 128], strides = [1, 1]} : vector<64x128xf32> to vector<8x128xf32>
    %179 = arith.addf %177, %178 : vector<8x128xf32>
    %180 = arith.negf %179 : vector<8x128xf32>
    %181 = math.exp %180 : vector<8x128xf32>
    %cst_38 = arith.constant 1.000000e+00 : f32
    %182 = vector.broadcast %cst_38 : f32 to vector<8x128xf32>
    %183 = arith.addf %182, %181 : vector<8x128xf32>
    %184 = arith.divf %182, %183 : vector<8x128xf32>
    %185 = math.tanh %179 : vector<8x128xf32>
    %186 = vector.extract_strided_slice %184 {offsets = [0, 0], sizes = [8, 32], strides = [1, 1]} : vector<8x128xf32> to vector<8x32xf32>
    %187 = vector.extract_strided_slice %184 {offsets = [0, 32], sizes = [8, 32], strides = [1, 1]} : vector<8x128xf32> to vector<8x32xf32>
    %188 = vector.extract_strided_slice %185 {offsets = [0, 64], sizes = [8, 32], strides = [1, 1]} : vector<8x128xf32> to vector<8x32xf32>
    %189 = vector.extract_strided_slice %184 {offsets = [0, 96], sizes = [8, 32], strides = [1, 1]} : vector<8x128xf32> to vector<8x32xf32>
    %190 = arith.mulf %187, %152 : vector<8x32xf32>
    %191 = arith.mulf %186, %188 : vector<8x32xf32>
    %192 = arith.addf %190, %191 : vector<8x32xf32>
    %193 = math.tanh %192 : vector<8x32xf32>
    %194 = arith.mulf %189, %193 : vector<8x32xf32>
    %195 = arith.truncf %194 : vector<8x32xf32> to vector<8x32xbf16>
    %cst_39 = arith.constant dense<0.000000e+00> : vector<8x128xf32>
    %196 = tpu.matmul %195, %1, %cst_39 {dimension_numbers = #tpu.dot_dimension_numbers<[1], [0], [0], [1], [0, 0, 1, 1], [], []>} : vector<8x32xbf16>, vector<32x128xbf16>, vector<8x128xf32> -> vector<8x128xf32>
    %197 = arith.addf %196, %7 : vector<8x128xf32>
    %198 = arith.truncf %175 : vector<8x32xf32> to vector<8x32xbf16>
    %cst_40 = arith.constant dense<0.000000e+00> : vector<8x128xf32>
    %199 = tpu.matmul %198, %3, %cst_40 {dimension_numbers = #tpu.dot_dimension_numbers<[1], [0], [0], [1], [0, 0, 1, 1], [], []>} : vector<8x32xbf16>, vector<32x128xbf16>, vector<8x128xf32> -> vector<8x128xf32>
    %200 = arith.addf %199, %197 : vector<8x128xf32>
    %201 = arith.negf %200 : vector<8x128xf32>
    %202 = math.exp %201 : vector<8x128xf32>
    %cst_41 = arith.constant 1.000000e+00 : f32
    %203 = vector.broadcast %cst_41 : f32 to vector<8x128xf32>
    %204 = arith.addf %203, %202 : vector<8x128xf32>
    %205 = arith.divf %203, %204 : vector<8x128xf32>
    %206 = math.tanh %200 : vector<8x128xf32>
    %207 = vector.extract_strided_slice %205 {offsets = [0, 0], sizes = [8, 32], strides = [1, 1]} : vector<8x128xf32> to vector<8x32xf32>
    %208 = vector.extract_strided_slice %205 {offsets = [0, 32], sizes = [8, 32], strides = [1, 1]} : vector<8x128xf32> to vector<8x32xf32>
    %209 = vector.extract_strided_slice %206 {offsets = [0, 64], sizes = [8, 32], strides = [1, 1]} : vector<8x128xf32> to vector<8x32xf32>
    %210 = vector.extract_strided_slice %205 {offsets = [0, 96], sizes = [8, 32], strides = [1, 1]} : vector<8x128xf32> to vector<8x32xf32>
    %211 = arith.mulf %208, %173 : vector<8x32xf32>
    %212 = arith.mulf %207, %209 : vector<8x32xf32>
    %213 = arith.addf %211, %212 : vector<8x32xf32>
    %214 = math.tanh %213 : vector<8x32xf32>
    %215 = arith.mulf %210, %214 : vector<8x32xf32>
    %216 = arith.truncf %194 : vector<8x32xf32> to vector<8x32xbf16>
    %cst_42 = arith.constant dense<0.000000e+00> : vector<8x128xf32>
    %217 = tpu.matmul %216, %2, %cst_42 {dimension_numbers = #tpu.dot_dimension_numbers<[1], [0], [0], [1], [0, 0, 1, 1], [], []>} : vector<8x32xbf16>, vector<32x128xbf16>, vector<8x128xf32> -> vector<8x128xf32>
    %218 = vector.extract_strided_slice %11 {offsets = [40, 0], sizes = [8, 128], strides = [1, 1]} : vector<64x128xf32> to vector<8x128xf32>
    %219 = arith.addf %217, %218 : vector<8x128xf32>
    %220 = arith.negf %219 : vector<8x128xf32>
    %221 = math.exp %220 : vector<8x128xf32>
    %cst_43 = arith.constant 1.000000e+00 : f32
    %222 = vector.broadcast %cst_43 : f32 to vector<8x128xf32>
    %223 = arith.addf %222, %221 : vector<8x128xf32>
    %224 = arith.divf %222, %223 : vector<8x128xf32>
    %225 = math.tanh %219 : vector<8x128xf32>
    %226 = vector.extract_strided_slice %224 {offsets = [0, 0], sizes = [8, 32], strides = [1, 1]} : vector<8x128xf32> to vector<8x32xf32>
    %227 = vector.extract_strided_slice %224 {offsets = [0, 32], sizes = [8, 32], strides = [1, 1]} : vector<8x128xf32> to vector<8x32xf32>
    %228 = vector.extract_strided_slice %225 {offsets = [0, 64], sizes = [8, 32], strides = [1, 1]} : vector<8x128xf32> to vector<8x32xf32>
    %229 = vector.extract_strided_slice %224 {offsets = [0, 96], sizes = [8, 32], strides = [1, 1]} : vector<8x128xf32> to vector<8x32xf32>
    %230 = arith.mulf %227, %192 : vector<8x32xf32>
    %231 = arith.mulf %226, %228 : vector<8x32xf32>
    %232 = arith.addf %230, %231 : vector<8x32xf32>
    %233 = math.tanh %232 : vector<8x32xf32>
    %234 = arith.mulf %229, %233 : vector<8x32xf32>
    %235 = arith.truncf %234 : vector<8x32xf32> to vector<8x32xbf16>
    %cst_44 = arith.constant dense<0.000000e+00> : vector<8x128xf32>
    %236 = tpu.matmul %235, %1, %cst_44 {dimension_numbers = #tpu.dot_dimension_numbers<[1], [0], [0], [1], [0, 0, 1, 1], [], []>} : vector<8x32xbf16>, vector<32x128xbf16>, vector<8x128xf32> -> vector<8x128xf32>
    %237 = arith.addf %236, %7 : vector<8x128xf32>
    %238 = arith.truncf %215 : vector<8x32xf32> to vector<8x32xbf16>
    %cst_45 = arith.constant dense<0.000000e+00> : vector<8x128xf32>
    %239 = tpu.matmul %238, %3, %cst_45 {dimension_numbers = #tpu.dot_dimension_numbers<[1], [0], [0], [1], [0, 0, 1, 1], [], []>} : vector<8x32xbf16>, vector<32x128xbf16>, vector<8x128xf32> -> vector<8x128xf32>
    %240 = arith.addf %239, %237 : vector<8x128xf32>
    %241 = arith.negf %240 : vector<8x128xf32>
    %242 = math.exp %241 : vector<8x128xf32>
    %cst_46 = arith.constant 1.000000e+00 : f32
    %243 = vector.broadcast %cst_46 : f32 to vector<8x128xf32>
    %244 = arith.addf %243, %242 : vector<8x128xf32>
    %245 = arith.divf %243, %244 : vector<8x128xf32>
    %246 = math.tanh %240 : vector<8x128xf32>
    %247 = vector.extract_strided_slice %245 {offsets = [0, 0], sizes = [8, 32], strides = [1, 1]} : vector<8x128xf32> to vector<8x32xf32>
    %248 = vector.extract_strided_slice %245 {offsets = [0, 32], sizes = [8, 32], strides = [1, 1]} : vector<8x128xf32> to vector<8x32xf32>
    %249 = vector.extract_strided_slice %246 {offsets = [0, 64], sizes = [8, 32], strides = [1, 1]} : vector<8x128xf32> to vector<8x32xf32>
    %250 = vector.extract_strided_slice %245 {offsets = [0, 96], sizes = [8, 32], strides = [1, 1]} : vector<8x128xf32> to vector<8x32xf32>
    %251 = arith.mulf %248, %213 : vector<8x32xf32>
    %252 = arith.mulf %247, %249 : vector<8x32xf32>
    %253 = arith.addf %251, %252 : vector<8x32xf32>
    %254 = math.tanh %253 : vector<8x32xf32>
    %255 = arith.mulf %250, %254 : vector<8x32xf32>
    %256 = arith.truncf %234 : vector<8x32xf32> to vector<8x32xbf16>
    %cst_47 = arith.constant dense<0.000000e+00> : vector<8x128xf32>
    %257 = tpu.matmul %256, %2, %cst_47 {dimension_numbers = #tpu.dot_dimension_numbers<[1], [0], [0], [1], [0, 0, 1, 1], [], []>} : vector<8x32xbf16>, vector<32x128xbf16>, vector<8x128xf32> -> vector<8x128xf32>
    %258 = vector.extract_strided_slice %11 {offsets = [48, 0], sizes = [8, 128], strides = [1, 1]} : vector<64x128xf32> to vector<8x128xf32>
    %259 = arith.addf %257, %258 : vector<8x128xf32>
    %260 = arith.negf %259 : vector<8x128xf32>
    %261 = math.exp %260 : vector<8x128xf32>
    %cst_48 = arith.constant 1.000000e+00 : f32
    %262 = vector.broadcast %cst_48 : f32 to vector<8x128xf32>
    %263 = arith.addf %262, %261 : vector<8x128xf32>
    %264 = arith.divf %262, %263 : vector<8x128xf32>
    %265 = math.tanh %259 : vector<8x128xf32>
    %266 = vector.extract_strided_slice %264 {offsets = [0, 0], sizes = [8, 32], strides = [1, 1]} : vector<8x128xf32> to vector<8x32xf32>
    %267 = vector.extract_strided_slice %264 {offsets = [0, 32], sizes = [8, 32], strides = [1, 1]} : vector<8x128xf32> to vector<8x32xf32>
    %268 = vector.extract_strided_slice %265 {offsets = [0, 64], sizes = [8, 32], strides = [1, 1]} : vector<8x128xf32> to vector<8x32xf32>
    %269 = vector.extract_strided_slice %264 {offsets = [0, 96], sizes = [8, 32], strides = [1, 1]} : vector<8x128xf32> to vector<8x32xf32>
    %270 = arith.mulf %267, %232 : vector<8x32xf32>
    %271 = arith.mulf %266, %268 : vector<8x32xf32>
    %272 = arith.addf %270, %271 : vector<8x32xf32>
    %273 = math.tanh %272 : vector<8x32xf32>
    %274 = arith.mulf %269, %273 : vector<8x32xf32>
    %275 = arith.truncf %274 : vector<8x32xf32> to vector<8x32xbf16>
    %cst_49 = arith.constant dense<0.000000e+00> : vector<8x128xf32>
    %276 = tpu.matmul %275, %1, %cst_49 {dimension_numbers = #tpu.dot_dimension_numbers<[1], [0], [0], [1], [0, 0, 1, 1], [], []>} : vector<8x32xbf16>, vector<32x128xbf16>, vector<8x128xf32> -> vector<8x128xf32>
    %277 = arith.addf %276, %7 : vector<8x128xf32>
    %278 = arith.truncf %255 : vector<8x32xf32> to vector<8x32xbf16>
    %cst_50 = arith.constant dense<0.000000e+00> : vector<8x128xf32>
    %279 = tpu.matmul %278, %3, %cst_50 {dimension_numbers = #tpu.dot_dimension_numbers<[1], [0], [0], [1], [0, 0, 1, 1], [], []>} : vector<8x32xbf16>, vector<32x128xbf16>, vector<8x128xf32> -> vector<8x128xf32>
    %280 = arith.addf %279, %277 : vector<8x128xf32>
    %281 = arith.negf %280 : vector<8x128xf32>
    %282 = math.exp %281 : vector<8x128xf32>
    %cst_51 = arith.constant 1.000000e+00 : f32
    %283 = vector.broadcast %cst_51 : f32 to vector<8x128xf32>
    %284 = arith.addf %283, %282 : vector<8x128xf32>
    %285 = arith.divf %283, %284 : vector<8x128xf32>
    %286 = math.tanh %280 : vector<8x128xf32>
    %287 = vector.extract_strided_slice %285 {offsets = [0, 0], sizes = [8, 32], strides = [1, 1]} : vector<8x128xf32> to vector<8x32xf32>
    %288 = vector.extract_strided_slice %285 {offsets = [0, 32], sizes = [8, 32], strides = [1, 1]} : vector<8x128xf32> to vector<8x32xf32>
    %289 = vector.extract_strided_slice %286 {offsets = [0, 64], sizes = [8, 32], strides = [1, 1]} : vector<8x128xf32> to vector<8x32xf32>
    %290 = vector.extract_strided_slice %285 {offsets = [0, 96], sizes = [8, 32], strides = [1, 1]} : vector<8x128xf32> to vector<8x32xf32>
    %291 = arith.mulf %288, %253 : vector<8x32xf32>
    %292 = arith.mulf %287, %289 : vector<8x32xf32>
    %293 = arith.addf %291, %292 : vector<8x32xf32>
    %294 = math.tanh %293 : vector<8x32xf32>
    %295 = arith.mulf %290, %294 : vector<8x32xf32>
    %296 = arith.truncf %274 : vector<8x32xf32> to vector<8x32xbf16>
    %cst_52 = arith.constant dense<0.000000e+00> : vector<8x128xf32>
    %297 = tpu.matmul %296, %2, %cst_52 {dimension_numbers = #tpu.dot_dimension_numbers<[1], [0], [0], [1], [0, 0, 1, 1], [], []>} : vector<8x32xbf16>, vector<32x128xbf16>, vector<8x128xf32> -> vector<8x128xf32>
    %298 = vector.extract_strided_slice %11 {offsets = [56, 0], sizes = [8, 128], strides = [1, 1]} : vector<64x128xf32> to vector<8x128xf32>
    %299 = arith.addf %297, %298 : vector<8x128xf32>
    %300 = arith.negf %299 : vector<8x128xf32>
    %301 = math.exp %300 : vector<8x128xf32>
    %cst_53 = arith.constant 1.000000e+00 : f32
    %302 = vector.broadcast %cst_53 : f32 to vector<8x128xf32>
    %303 = arith.addf %302, %301 : vector<8x128xf32>
    %304 = arith.divf %302, %303 : vector<8x128xf32>
    %305 = math.tanh %299 : vector<8x128xf32>
    %306 = vector.extract_strided_slice %304 {offsets = [0, 0], sizes = [8, 32], strides = [1, 1]} : vector<8x128xf32> to vector<8x32xf32>
    %307 = vector.extract_strided_slice %304 {offsets = [0, 32], sizes = [8, 32], strides = [1, 1]} : vector<8x128xf32> to vector<8x32xf32>
    %308 = vector.extract_strided_slice %305 {offsets = [0, 64], sizes = [8, 32], strides = [1, 1]} : vector<8x128xf32> to vector<8x32xf32>
    %309 = vector.extract_strided_slice %304 {offsets = [0, 96], sizes = [8, 32], strides = [1, 1]} : vector<8x128xf32> to vector<8x32xf32>
    %310 = arith.mulf %307, %272 : vector<8x32xf32>
    %311 = arith.mulf %306, %308 : vector<8x32xf32>
    %312 = arith.addf %310, %311 : vector<8x32xf32>
    %313 = math.tanh %312 : vector<8x32xf32>
    %314 = arith.mulf %309, %313 : vector<8x32xf32>
    %315 = arith.truncf %314 : vector<8x32xf32> to vector<8x32xbf16>
    %cst_54 = arith.constant dense<0.000000e+00> : vector<8x128xf32>
    %316 = tpu.matmul %315, %1, %cst_54 {dimension_numbers = #tpu.dot_dimension_numbers<[1], [0], [0], [1], [0, 0, 1, 1], [], []>} : vector<8x32xbf16>, vector<32x128xbf16>, vector<8x128xf32> -> vector<8x128xf32>
    %317 = arith.addf %316, %7 : vector<8x128xf32>
    %318 = arith.truncf %295 : vector<8x32xf32> to vector<8x32xbf16>
    %cst_55 = arith.constant dense<0.000000e+00> : vector<8x128xf32>
    %319 = tpu.matmul %318, %3, %cst_55 {dimension_numbers = #tpu.dot_dimension_numbers<[1], [0], [0], [1], [0, 0, 1, 1], [], []>} : vector<8x32xbf16>, vector<32x128xbf16>, vector<8x128xf32> -> vector<8x128xf32>
    %320 = arith.addf %319, %317 : vector<8x128xf32>
    %321 = arith.negf %320 : vector<8x128xf32>
    %322 = math.exp %321 : vector<8x128xf32>
    %cst_56 = arith.constant 1.000000e+00 : f32
    %323 = vector.broadcast %cst_56 : f32 to vector<8x128xf32>
    %324 = arith.addf %323, %322 : vector<8x128xf32>
    %325 = arith.divf %323, %324 : vector<8x128xf32>
    %326 = math.tanh %320 : vector<8x128xf32>
    %327 = vector.extract_strided_slice %325 {offsets = [0, 0], sizes = [8, 32], strides = [1, 1]} : vector<8x128xf32> to vector<8x32xf32>
    %328 = vector.extract_strided_slice %325 {offsets = [0, 32], sizes = [8, 32], strides = [1, 1]} : vector<8x128xf32> to vector<8x32xf32>
    %329 = vector.extract_strided_slice %326 {offsets = [0, 64], sizes = [8, 32], strides = [1, 1]} : vector<8x128xf32> to vector<8x32xf32>
    %330 = vector.extract_strided_slice %325 {offsets = [0, 96], sizes = [8, 32], strides = [1, 1]} : vector<8x128xf32> to vector<8x32xf32>
    %331 = arith.mulf %328, %293 : vector<8x32xf32>
    %332 = arith.mulf %327, %329 : vector<8x32xf32>
    %333 = arith.addf %331, %332 : vector<8x32xf32>
    %334 = math.tanh %333 : vector<8x32xf32>
    %335 = arith.mulf %330, %334 : vector<8x32xf32>
    %336 = arith.truncf %335 : vector<8x32xf32> to vector<8x32xbf16>
    %c0_57 = arith.constant 0 : index
    %c0_58 = arith.constant 0 : index
    %337 = vector.load %arg7[%c0_57, %c0_58] : memref<32x20xbf16, #tpu.memory_space<vmem>>, vector<32x20xbf16>
    %cst_59 = arith.constant dense<0.000000e+00> : vector<8x20xf32>
    %338 = tpu.matmul %336, %337, %cst_59 {dimension_numbers = #tpu.dot_dimension_numbers<[1], [0], [0], [1], [0, 0, 1, 1], [], []>} : vector<8x32xbf16>, vector<32x20xbf16>, vector<8x20xf32> -> vector<8x20xf32>
    %c0_60 = arith.constant 0 : index
    %c0_61 = arith.constant 0 : index
    %339 = vector.load %arg8[%c0_60, %c0_61] : memref<1x20xf32, #tpu.memory_space<vmem>>, vector<1x20xf32>
    %340 = vector.broadcast %339 : vector<1x20xf32> to vector<8x20xf32>
    %341 = arith.addf %338, %340 : vector<8x20xf32>
    %c0_62 = arith.constant 0 : index
    %c0_63 = arith.constant 0 : index
    %342 = vector.load %arg9[%c0_62, %c0_63] : memref<8x20xf32, #tpu.memory_space<vmem>>, vector<8x20xf32>
    tpu.vector_store %arg9[%c0_62, %c0_63], %341 {strides = array<i32>} : memref<8x20xf32, #tpu.memory_space<vmem>>, vector<8x20xf32>,
    return
  }
}

</mosaic_0001>

<llo_original>
// kernel: lstm_fc_forward.1
$region0: #{lstm_fc_forward.1}
  #allocation0 [shape = 'u32[]', space=smem, size = 0x4, offset = 0x4, fixed_abs, tag = 'smem constant byte address 0x4 - core index']
  #allocation1 [shape = 'u32[144,128]{1,0:T(1,128)}', space=vmem, size = 0x12000, scoped, tag = 'internal scratch']
  %s0 = inlined_call_operand.vmem [shape: bf16[64,16], index: 0, kind: input, shape index: {}]
  %s1 = inlined_call_operand.vmem [shape: bf16[16,128], index: 1, kind: input, shape index: {}]
  %s2 = inlined_call_operand.vmem [shape: bf16[32,128], index: 2, kind: input, shape index: {}]
  %s3 = inlined_call_operand.vmem [shape: f32[1,128], index: 3, kind: input, shape index: {}]
  %s4 = inlined_call_operand.vmem [shape: bf16[32,128], index: 4, kind: input, shape index: {}]
  %s5 = inlined_call_operand.vmem [shape: bf16[32,128], index: 5, kind: input, shape index: {}]
  %s6 = inlined_call_operand.vmem [shape: f32[1,128], index: 6, kind: input, shape index: {}]
  %s7 = inlined_call_operand.vmem [shape: bf16[32,20], index: 7, kind: input, shape index: {}]
  %s8 = inlined_call_operand.vmem [shape: f32[1,20], index: 8, kind: input, shape index: {}]
  %s9 = inlined_call_operand.vmem [shape: f32[8,20], index: 9, kind: output, shape index: {}]
  %s10 = sld [smem:[#allocation0]]
  $region46: #{lstm_fc_forward.1} parent=0
    _
  %s12 = ssub.s32 1, %s10
  %s13 = scalar_select 0, %s12, %s10
  // Predicated region
  $region2: #{lstm_fc_forward.1} parent=0 // pred_check
    _
  $region3: #{lstm_fc_forward.1} parent=0 // pred_check_branch
    %15 = sbr.rel (0) target = $region5
  $region4: #{lstm_fc_forward.1} parent=0 // pred_region
    _
  $region5: #{lstm_fc_forward.1} parent=0 // pred_fallthru
    _
  // Predicated region
  $region6: #{lstm_fc_forward.1} parent=0 // pred_check
    _
  $region7: #{lstm_fc_forward.1} parent=0 // pred_check_branch
    %17 = sbr.rel (0) target = $region9
  $region8: #{lstm_fc_forward.1} parent=0 // pred_region
    _
  $region9: #{lstm_fc_forward.1} parent=0 // pred_fallthru
    _
  // Predicated region
  $region10: #{lstm_fc_forward.1} parent=0 // pred_check
    _
  $region11: #{lstm_fc_forward.1} parent=0 // pred_check_branch
    %19 = sbr.rel (0) target = $region13
  $region12: #{lstm_fc_forward.1} parent=0 // pred_region
    _
  $region13: #{lstm_fc_forward.1} parent=0 // pred_fallthru
    _
  // Predicated region
  $region14: #{lstm_fc_forward.1} parent=0 // pred_check
    _
  $region15: #{lstm_fc_forward.1} parent=0 // pred_check_branch
    %21 = sbr.rel (0) target = $region17
  $region16: #{lstm_fc_forward.1} parent=0 // pred_region
    _
  $region17: #{lstm_fc_forward.1} parent=0 // pred_fallthru
    _
  // Predicated region
  $region18: #{lstm_fc_forward.1} parent=0 // pred_check
    _
  $region19: #{lstm_fc_forward.1} parent=0 // pred_check_branch
    %23 = sbr.rel (0) target = $region21
  $region20: #{lstm_fc_forward.1} parent=0 // pred_region
    _
  $region21: #{lstm_fc_forward.1} parent=0 // pred_fallthru
    _
  // Predicated region
  $region22: #{lstm_fc_forward.1} parent=0 // pred_check
    _
  $region23: #{lstm_fc_forward.1} parent=0 // pred_check_branch
    %25 = sbr.rel (0) target = $region25
  $region24: #{lstm_fc_forward.1} parent=0 // pred_region
    _
  $region25: #{lstm_fc_forward.1} parent=0 // pred_fallthru
    _
  // Predicated region
  $region26: #{lstm_fc_forward.1} parent=0 // pred_check
    _
  $region27: #{lstm_fc_forward.1} parent=0 // pred_check_branch
    %27 = sbr.rel (0) target = $region29
  $region28: #{lstm_fc_forward.1} parent=0 // pred_region
    _
  $region29: #{lstm_fc_forward.1} parent=0 // pred_fallthru
    _
  // Predicated region
  $region30: #{lstm_fc_forward.1} parent=0 // pred_check
    _
  $region31: #{lstm_fc_forward.1} parent=0 // pred_check_branch
    %29 = sbr.rel (0) target = $region33
  $region32: #{lstm_fc_forward.1} parent=0 // pred_region
    _
  $region33: #{lstm_fc_forward.1} parent=0 // pred_fallthru
    _
  // Predicated region
  $region34: #{lstm_fc_forward.1} parent=0 // pred_check
    _
  $region35: #{lstm_fc_forward.1} parent=0 // pred_check_branch
    %31 = sbr.rel (0) target = $region37
  $region36: #{lstm_fc_forward.1} parent=0 // pred_region
    _
  $region37: #{lstm_fc_forward.1} parent=0 // pred_fallthru
    _
  %v33 = vld [vmem:[%s1] sm:$0xf]
  %v34 = vld [vmem:[%s1 + $0x4] sm:$0xf]
  %v35 = vld [vmem:[%s4] sm:$0xf]
  %v36 = vld [vmem:[%s4 + $0x4] sm:$0xf]
  %v37 = vld [vmem:[%s4 + $0x8] sm:$0xf]
  %v38 = vld [vmem:[%s4 + $0xc] sm:$0xf]
  %v39 = vld [vmem:[%s2] sm:$0xf]
  %v40 = vld [vmem:[%s2 + $0x4] sm:$0xf]
  %v41 = vld [vmem:[%s2 + $0x8] sm:$0xf]
  %v42 = vld [vmem:[%s2 + $0xc] sm:$0xf]
  %v43 = vld [vmem:[%s5] sm:$0xf]
  %v44 = vld [vmem:[%s5 + $0x4] sm:$0xf]
  %v45 = vld [vmem:[%s5 + $0x8] sm:$0xf]
  %v46 = vld [vmem:[%s5 + $0xc] sm:$0xf]
  %v47 = vld [vmem:[%s3] sm:$0x1]
  %v48 = vld [vmem:[%s6] sm:$0x1]
  %v50 = vlaneseq
  %v51 = vshrl.u32 %v50, 7
  %v52 = vsub.s32 0, %v51
  %v53 = vrot.slane %v48, %v52
  %v55 = vld [vmem:[%s0] sm:$0xf]
  %v56 = vld [vmem:[%s0 + $0x4] sm:$0xf]
  %v57 = vld [vmem:[%s0 + $0x8] sm:$0xf]
  %v58 = vld [vmem:[%s0 + $0xc] sm:$0xf]
  %v59 = vld [vmem:[%s0 + $0x10] sm:$0xf]
  %v60 = vld [vmem:[%s0 + $0x14] sm:$0xf]
  %v61 = vld [vmem:[%s0 + $0x18] sm:$0xf]
  %v62 = vld [vmem:[%s0 + $0x1c] sm:$0xf]
  %v64 = vlaneseq
  %v65 = vshrl.u32 %v64, 7
  %v66 = vsub.s32 0, %v65
  %v67 = vrot.slane %v47, %v66
  %v77 = vunpack.c.l.b16 %v55
  %v78 = vunpack.c.l.b16 %v56
  %v79 = vunpack.c.l.b16 %v57
  %v80 = vunpack.c.l.b16 %v58
  %v81 = vunpack.c.l.b16 %v59
  %v82 = vunpack.c.l.b16 %v60
  %v83 = vunpack.c.l.b16 %v61
  %v84 = vunpack.c.l.b16 %v62
  %v85 = vpack.c.b16 %v78, %v77
  %v86 = vpack.c.b16 %v80, %v79
  %v87 = vpack.c.b16 %v82, %v81
  %v88 = vpack.c.b16 %v84, %v83
  %v91 = vunpack.c.l.b16 %v33
  %v92 = vunpack.c.l.b16 %v34
  %v93 = vpack.c.b16 %v92, %v91
  %vm95 = vcmask 130048
  %v97 = vsel %vm95, %v85, 0
  %v100 = vsel %vm95, %v86, 0
  %v103 = vsel %vm95, %v87, 0
  %v106 = vsel %vm95, %v88, 0
  %108 = vmatprep.subr.bf16.mxu0 0
  %109 = vmatpush1.bf16.msra.mxu0 0
  %110 = vmatprep.subr.bf16.mxu0 0
  %111 = vmatpush1.bf16.msra.mxu0 0
  %112 = vmatprep.subr.bf16.mxu0 0
  %113 = vmatpush1.bf16.msra.mxu0 0
  %114 = vmatprep.subr.bf16.mxu0 0
  %115 = vmatpush1.bf16.msra.mxu0 0
  %116 = vmatprep.subr.bf16.mxu0 0
  %117 = vmatpush1.bf16.msra.mxu0 0
  %118 = vmatprep.subr.bf16.mxu0 0
  %119 = vmatpush1.bf16.msra.mxu0 0
  %120 = vmatprep.subr.bf16.mxu0 0
  %121 = vmatpush1.bf16.msra.mxu0 0
  %122 = vmatprep.subr.bf16.mxu0 0
  %123 = vmatpush1.bf16.msra.mxu0 %v93
  %124 = vmatprep.subr.bf16.mxu0 0
  %125 = vmatpush2.bf16.msra.mxu0 0
  %126 = vmatprep.subr.bf16.mxu0 0
  %127 = vmatpush2.bf16.msra.mxu0 0
  %128 = vmatprep.subr.bf16.mxu0 0
  %129 = vmatpush2.bf16.msra.mxu0 0
  %130 = vmatprep.subr.bf16.mxu0 0
  %131 = vmatpush2.bf16.msra.mxu0 0
  %132 = vmatprep.subr.bf16.mxu0 0
  %133 = vmatpush2.bf16.msra.mxu0 0
  %134 = vmatprep.subr.bf16.mxu0 0
  %135 = vmatpush2.bf16.msra.mxu0 0
  %136 = vmatprep.subr.bf16.mxu0 0
  %137 = vmatpush2.bf16.msra.mxu0 0
  %138 = vmatprep.subr.bf16.mxu0 0
  %139 = vmatpush2.bf16.msra.mxu0 0
  %140 = vmatprep.mubr.bf16.mxu0 0
  %141 = vmatmul.mubr.bf16.gmra.mxu0 %v97
  %v142 = vpop.f32.mrf.mxu0
  %v143 = vadd.f32 %v67, %v142
  %v144 = vpop.f32.mrf.mxu0
  %v145 = vpop.f32.mrf.mxu0
  %v146 = vadd.f32 %v67, %v145
  %v147 = vpop.f32.mrf.mxu0
  %148 = vmatprep.mubr.bf16.mxu0 0
  %149 = vmatmul.mubr.bf16.gmra.mxu0 %v100
  %v150 = vpop.f32.mrf.mxu0
  %v151 = vadd.f32 %v67, %v150
  %v152 = vpop.f32.mrf.mxu0
  %v153 = vpop.f32.mrf.mxu0
  %v154 = vadd.f32 %v67, %v153
  %v155 = vpop.f32.mrf.mxu0
  %156 = vmatprep.mubr.bf16.mxu0 0
  %157 = vmatmul.mubr.bf16.gmra.mxu0 %v103
  %v158 = vpop.f32.mrf.mxu0
  %v159 = vadd.f32 %v67, %v158
  %v160 = vpop.f32.mrf.mxu0
  %v161 = vpop.f32.mrf.mxu0
  %v162 = vadd.f32 %v67, %v161
  %v163 = vpop.f32.mrf.mxu0
  %164 = vmatprep.mubr.bf16.mxu0 0
  %165 = vmatmul.mubr.bf16.gmra.mxu0 %v106
  %v166 = vpop.f32.mrf.mxu0
  %v167 = vadd.f32 %v67, %v166
  %v168 = vpop.f32.mrf.mxu0
  %v169 = vpop.f32.mrf.mxu0
  %v170 = vadd.f32 %v67, %v169
  %v171 = vpop.f32.mrf.mxu0
  %172 = vdwg.mxu0
  %v177 = vunpack.c.l.b16 %v39
  %v178 = vunpack.c.l.b16 %v40
  %v179 = vunpack.c.l.b16 %v41
  %v180 = vunpack.c.l.b16 %v42
  %v181 = vpack.c.b16 %v178, %v177
  %v182 = vpack.c.b16 %v180, %v179
  %vm185 = vcmask 261120
  %v187 = vsel %vm185, 0, 0
  %189 = vmatprep.subr.bf16.mxu0 0
  %190 = vmatpush1.bf16.msra.mxu0 0
  %191 = vmatprep.subr.bf16.mxu0 0
  %192 = vmatpush1.bf16.msra.mxu0 0
  %193 = vmatprep.subr.bf16.mxu0 0
  %194 = vmatpush1.bf16.msra.mxu0 0
  %195 = vmatprep.subr.bf16.mxu0 0
  %196 = vmatpush1.bf16.msra.mxu0 0
  %197 = vmatprep.subr.bf16.mxu0 0
  %198 = vmatpush1.bf16.msra.mxu0 0
  %199 = vmatprep.subr.bf16.mxu0 0
  %200 = vmatpush1.bf16.msra.mxu0 0
  %201 = vmatprep.subr.bf16.mxu0 0
  %202 = vmatpush1.bf16.msra.mxu0 %v182
  %203 = vmatprep.subr.bf16.mxu0 0
  %204 = vmatpush1.bf16.msra.mxu0 %v181
  %205 = vmatprep.subr.bf16.mxu0 0
  %206 = vmatpush2.bf16.msra.mxu0 0
  %207 = vmatprep.subr.bf16.mxu0 0
  %208 = vmatpush2.bf16.msra.mxu0 0
  %209 = vmatprep.subr.bf16.mxu0 0
  %210 = vmatpush2.bf16.msra.mxu0 0
  %211 = vmatprep.subr.bf16.mxu0 0
  %212 = vmatpush2.bf16.msra.mxu0 0
  %213 = vmatprep.subr.bf16.mxu0 0
  %214 = vmatpush2.bf16.msra.mxu0 0
  %215 = vmatprep.subr.bf16.mxu0 0
  %216 = vmatpush2.bf16.msra.mxu0 0
  %217 = vmatprep.subr.bf16.mxu0 0
  %218 = vmatpush2.bf16.msra.mxu0 0
  %219 = vmatprep.subr.bf16.mxu0 0
  %220 = vmatpush2.bf16.msra.mxu0 0
  %221 = vmatprep.mubr.bf16.mxu0 0
  %222 = vmatmul.mubr.bf16.gmra.mxu0 %v187
  %v223 = vpop.f32.mrf.mxu0
  %v224 = vadd.f32 %v143, %v223
  %v225 = vpop.f32.mrf.mxu0
  %v226 = vpop.f32.mrf.mxu0
  %v227 = vpop.f32.mrf.mxu0
  %228 = vdwg.mxu0
  %v229 = vxor.u32 %v224, 2147483648
  %v230 = vmul.f32 %v229, 1.442695
  %v231 = vpow.pop %v230
  %v232 = vadd.f32 %v231, 1.0
  %v233 = vrcp.pop %v232
  %v234 = vmul.f32 1.0, %v233
  %v235 = vtanh.pop %v224
  %v236 = vmul.f32 %v234, 0.0
  %238 = vrot.lane.b32.xlu0 %v235, 64
  %v239 = vpop.permute.xlu0 %238
  %v241 = vmul.f32 %v234, %v239
  %243 = vrot.lane.b32.xlu0 %v241, 32
  %v244 = vpop.permute.xlu0 %243
  %v246 = vadd.f32 %v236, %v244
  %v247 = vtanh.pop %v246
  %249 = vrot.lane.b32.xlu0 %v247, 64
  %v250 = vpop.permute.xlu0 %249
  %v252 = vmul.f32 %v234, %v250
  %v253 = vpack.c.bf16 %v252, %v252
  %255 = vrot.lane.b32.xlu0 %v253, 32
  %v256 = vpop.permute.xlu0 %255
  %v261 = vunpack.c.l.b16 %v35
  %v262 = vunpack.c.l.b16 %v36
  %v263 = vunpack.c.l.b16 %v37
  %v264 = vunpack.c.l.b16 %v38
  %v265 = vpack.c.b16 %v262, %v261
  %v266 = vpack.c.b16 %v264, %v263
  %v270 = vsel %vm185, %v256, 0
  %272 = vmatprep.subr.bf16.mxu0 0
  %273 = vmatpush1.bf16.msra.mxu0 0
  %274 = vmatprep.subr.bf16.mxu0 0
  %275 = vmatpush1.bf16.msra.mxu0 0
  %276 = vmatprep.subr.bf16.mxu0 0
  %277 = vmatpush1.bf16.msra.mxu0 0
  %278 = vmatprep.subr.bf16.mxu0 0
  %279 = vmatpush1.bf16.msra.mxu0 0
  %280 = vmatprep.subr.bf16.mxu0 0
  %281 = vmatpush1.bf16.msra.mxu0 0
  %282 = vmatprep.subr.bf16.mxu0 0
  %283 = vmatpush1.bf16.msra.mxu0 0
  %284 = vmatprep.subr.bf16.mxu0 0
  %285 = vmatpush1.bf16.msra.mxu0 %v266
  %286 = vmatprep.subr.bf16.mxu0 0
  %287 = vmatpush1.bf16.msra.mxu0 %v265
  %288 = vmatprep.subr.bf16.mxu0 0
  %289 = vmatpush2.bf16.msra.mxu0 0
  %290 = vmatprep.subr.bf16.mxu0 0
  %291 = vmatpush2.bf16.msra.mxu0 0
  %292 = vmatprep.subr.bf16.mxu0 0
  %293 = vmatpush2.bf16.msra.mxu0 0
  %294 = vmatprep.subr.bf16.mxu0 0
  %295 = vmatpush2.bf16.msra.mxu0 0
  %296 = vmatprep.subr.bf16.mxu0 0
  %297 = vmatpush2.bf16.msra.mxu0 0
  %298 = vmatprep.subr.bf16.mxu0 0
  %299 = vmatpush2.bf16.msra.mxu0 0
  %300 = vmatprep.subr.bf16.mxu0 0
  %301 = vmatpush2.bf16.msra.mxu0 0
  %302 = vmatprep.subr.bf16.mxu0 0
  %303 = vmatpush2.bf16.msra.mxu0 0
  %304 = vmatprep.mubr.bf16.mxu0 0
  %305 = vmatmul.mubr.bf16.gmra.mxu0 %v270
  %v306 = vpop.f32.mrf.mxu0
  %v307 = vadd.f32 %v53, %v306
  %v308 = vpop.f32.mrf.mxu0
  %v309 = vpop.f32.mrf.mxu0
  %v310 = vpop.f32.mrf.mxu0
  %311 = vdwg.mxu0
  %v316 = vunpack.c.l.b16 %v43
  %v317 = vunpack.c.l.b16 %v44
  %v318 = vunpack.c.l.b16 %v45
  %v319 = vunpack.c.l.b16 %v46
  %v320 = vpack.c.b16 %v317, %v316
  %v321 = vpack.c.b16 %v319, %v318
  %324 = vmatprep.subr.bf16.mxu0 0
  %325 = vmatpush1.bf16.msra.mxu0 0
  %326 = vmatprep.subr.bf16.mxu0 0
  %327 = vmatpush1.bf16.msra.mxu0 0
  %328 = vmatprep.subr.bf16.mxu0 0
  %329 = vmatpush1.bf16.msra.mxu0 0
  %330 = vmatprep.subr.bf16.mxu0 0
  %331 = vmatpush1.bf16.msra.mxu0 0
  %332 = vmatprep.subr.bf16.mxu0 0
  %333 = vmatpush1.bf16.msra.mxu0 0
  %334 = vmatprep.subr.bf16.mxu0 0
  %335 = vmatpush1.bf16.msra.mxu0 0
  %336 = vmatprep.subr.bf16.mxu0 0
  %337 = vmatpush1.bf16.msra.mxu0 %v321
  %338 = vmatprep.subr.bf16.mxu0 0
  %339 = vmatpush1.bf16.msra.mxu0 %v320
  %340 = vmatprep.subr.bf16.mxu0 0
  %341 = vmatpush2.bf16.msra.mxu0 0
  %342 = vmatprep.subr.bf16.mxu0 0
  %343 = vmatpush2.bf16.msra.mxu0 0
  %344 = vmatprep.subr.bf16.mxu0 0
  %345 = vmatpush2.bf16.msra.mxu0 0
  %346 = vmatprep.subr.bf16.mxu0 0
  %347 = vmatpush2.bf16.msra.mxu0 0
  %348 = vmatprep.subr.bf16.mxu0 0
  %349 = vmatpush2.bf16.msra.mxu0 0
  %350 = vmatprep.subr.bf16.mxu0 0
  %351 = vmatpush2.bf16.msra.mxu0 0
  %352 = vmatprep.subr.bf16.mxu0 0
  %353 = vmatpush2.bf16.msra.mxu0 0
  %354 = vmatprep.subr.bf16.mxu0 0
  %355 = vmatpush2.bf16.msra.mxu0 0
  %356 = vmatprep.mubr.bf16.mxu0 0
  %357 = vmatmul.mubr.bf16.gmra.mxu0 %v187
  %v358 = vpop.f32.mrf.mxu0
  %v359 = vadd.f32 %v307, %v358
  %v360 = vpop.f32.mrf.mxu0
  %v361 = vpop.f32.mrf.mxu0
  %v362 = vpop.f32.mrf.mxu0
  %363 = vdwg.mxu0
  %v364 = vxor.u32 %v359, 2147483648
  %v365 = vmul.f32 %v364, 1.442695
  %v366 = vpow.pop %v365
  %v367 = vadd.f32 %v366, 1.0
  %v368 = vrcp.pop %v367
  %v369 = vmul.f32 1.0, %v368
  %v370 = vtanh.pop %v359
  %v371 = vmul.f32 %v369, 0.0
  %373 = vrot.lane.b32.xlu0 %v370, 64
  %v374 = vpop.permute.xlu0 %373
  %v376 = vmul.f32 %v369, %v374
  %378 = vrot.lane.b32.xlu0 %v376, 32
  %v379 = vpop.permute.xlu0 %378
  %v381 = vadd.f32 %v371, %v379
  %v382 = vtanh.pop %v381
  %384 = vrot.lane.b32.xlu0 %v382, 64
  %v385 = vpop.permute.xlu0 %384
  %v387 = vmul.f32 %v369, %v385
  %388 = vmatprep.subr.bf16.mxu0 0
  %389 = vmatpush1.bf16.msra.mxu0 0
  %390 = vmatprep.subr.bf16.mxu0 0
  %391 = vmatpush1.bf16.msra.mxu0 0
  %392 = vmatprep.subr.bf16.mxu0 0
  %393 = vmatpush1.bf16.msra.mxu0 0
  %394 = vmatprep.subr.bf16.mxu0 0
  %395 = vmatpush1.bf16.msra.mxu0 0
  %396 = vmatprep.subr.bf16.mxu0 0
  %397 = vmatpush1.bf16.msra.mxu0 0
  %398 = vmatprep.subr.bf16.mxu0 0
  %399 = vmatpush1.bf16.msra.mxu0 0
  %400 = vmatprep.subr.bf16.mxu0 0
  %401 = vmatpush1.bf16.msra.mxu0 %v182
  %402 = vmatprep.subr.bf16.mxu0 0
  %403 = vmatpush1.bf16.msra.mxu0 %v181
  %404 = vmatprep.subr.bf16.mxu0 0
  %405 = vmatpush2.bf16.msra.mxu0 0
  %406 = vmatprep.subr.bf16.mxu0 0
  %407 = vmatpush2.bf16.msra.mxu0 0
  %408 = vmatprep.subr.bf16.mxu0 0
  %409 = vmatpush2.bf16.msra.mxu0 0
  %410 = vmatprep.subr.bf16.mxu0 0
  %411 = vmatpush2.bf16.msra.mxu0 0
  %412 = vmatprep.subr.bf16.mxu0 0
  %413 = vmatpush2.bf16.msra.mxu0 0
  %414 = vmatprep.subr.bf16.mxu0 0
  %415 = vmatpush2.bf16.msra.mxu0 0
  %416 = vmatprep.subr.bf16.mxu0 0
  %417 = vmatpush2.bf16.msra.mxu0 0
  %418 = vmatprep.subr.bf16.mxu0 0
  %419 = vmatpush2.bf16.msra.mxu0 0
  %420 = vmatprep.mubr.bf16.mxu0 0
  %421 = vmatmul.mubr.bf16.gmra.mxu0 %v270
  %v422 = vpop.f32.mrf.mxu0
  %v423 = vadd.f32 %v146, %v422
  %v424 = vpop.f32.mrf.mxu0
  %v425 = vpop.f32.mrf.mxu0
  %v426 = vpop.f32.mrf.mxu0
  %427 = vdwg.mxu0
  %v428 = vxor.u32 %v423, 2147483648
  %v429 = vmul.f32 %v428, 1.442695
  %v430 = vpow.pop %v429
  %v431 = vadd.f32 %v430, 1.0
  %v432 = vrcp.pop %v431
  %v433 = vmul.f32 1.0, %v432
  %v434 = vtanh.pop %v423
  %v435 = vmul.f32 %v433, %v246
  %437 = vrot.lane.b32.xlu0 %v434, 64
  %v438 = vpop.permute.xlu0 %437
  %v440 = vmul.f32 %v433, %v438
  %442 = vrot.lane.b32.xlu0 %v440, 32
  %v443 = vpop.permute.xlu0 %442
  %v445 = vadd.f32 %v435, %v443
  %v446 = vtanh.pop %v445
  %448 = vrot.lane.b32.xlu0 %v446, 64
  %v449 = vpop.permute.xlu0 %448
  %v451 = vmul.f32 %v433, %v449
  %v452 = vpack.c.bf16 %v451, %v451
  %454 = vrot.lane.b32.xlu0 %v452, 32
  %v455 = vpop.permute.xlu0 %454
  %v457 = vsel %vm185, %v455, 0
  %459 = vmatprep.subr.bf16.mxu0 0
  %460 = vmatpush1.bf16.msra.mxu0 0
  %461 = vmatprep.subr.bf16.mxu0 0
  %462 = vmatpush1.bf16.msra.mxu0 0
  %463 = vmatprep.subr.bf16.mxu0 0
  %464 = vmatpush1.bf16.msra.mxu0 0
  %465 = vmatprep.subr.bf16.mxu0 0
  %466 = vmatpush1.bf16.msra.mxu0 0
  %467 = vmatprep.subr.bf16.mxu0 0
  %468 = vmatpush1.bf16.msra.mxu0 0
  %469 = vmatprep.subr.bf16.mxu0 0
  %470 = vmatpush1.bf16.msra.mxu0 0
  %471 = vmatprep.subr.bf16.mxu0 0
  %472 = vmatpush1.bf16.msra.mxu0 %v266
  %473 = vmatprep.subr.bf16.mxu0 0
  %474 = vmatpush1.bf16.msra.mxu0 %v265
  %475 = vmatprep.subr.bf16.mxu0 0
  %476 = vmatpush2.bf16.msra.mxu0 0
  %477 = vmatprep.subr.bf16.mxu0 0
  %478 = vmatpush2.bf16.msra.mxu0 0
  %479 = vmatprep.subr.bf16.mxu0 0
  %480 = vmatpush2.bf16.msra.mxu0 0
  %481 = vmatprep.subr.bf16.mxu0 0
  %482 = vmatpush2.bf16.msra.mxu0 0
  %483 = vmatprep.subr.bf16.mxu0 0
  %484 = vmatpush2.bf16.msra.mxu0 0
  %485 = vmatprep.subr.bf16.mxu0 0
  %486 = vmatpush2.bf16.msra.mxu0 0
  %487 = vmatprep.subr.bf16.mxu0 0
  %488 = vmatpush2.bf16.msra.mxu0 0
  %489 = vmatprep.subr.bf16.mxu0 0
  %490 = vmatpush2.bf16.msra.mxu0 0
  %491 = vmatprep.mubr.bf16.mxu0 0
  %492 = vmatmul.mubr.bf16.gmra.mxu0 %v457
  %v493 = vpop.f32.mrf.mxu0
  %v494 = vadd.f32 %v53, %v493
  %v495 = vpop.f32.mrf.mxu0
  %v496 = vpop.f32.mrf.mxu0
  %v497 = vpop.f32.mrf.mxu0
  %498 = vdwg.mxu0
  %v499 = vpack.c.bf16 %v387, %v387
  %501 = vrot.lane.b32.xlu0 %v499, 32
  %v502 = vpop.permute.xlu0 %501
  %v504 = vsel %vm185, %v502, 0
  %506 = vmatprep.subr.bf16.mxu0 0
  %507 = vmatpush1.bf16.msra.mxu0 0
  %508 = vmatprep.subr.bf16.mxu0 0
  %509 = vmatpush1.bf16.msra.mxu0 0
  %510 = vmatprep.subr.bf16.mxu0 0
  %511 = vmatpush1.bf16.msra.mxu0 0
  %512 = vmatprep.subr.bf16.mxu0 0
  %513 = vmatpush1.bf16.msra.mxu0 0
  %514 = vmatprep.subr.bf16.mxu0 0
  %515 = vmatpush1.bf16.msra.mxu0 0
  %516 = vmatprep.subr.bf16.mxu0 0
  %517 = vmatpush1.bf16.msra.mxu0 0
  %518 = vmatprep.subr.bf16.mxu0 0
  %519 = vmatpush1.bf16.msra.mxu0 %v321
  %520 = vmatprep.subr.bf16.mxu0 0
  %521 = vmatpush1.bf16.msra.mxu0 %v320
  %522 = vmatprep.subr.bf16.mxu0 0
  %523 = vmatpush2.bf16.msra.mxu0 0
  %524 = vmatprep.subr.bf16.mxu0 0
  %525 = vmatpush2.bf16.msra.mxu0 0
  %526 = vmatprep.subr.bf16.mxu0 0
  %527 = vmatpush2.bf16.msra.mxu0 0
  %528 = vmatprep.subr.bf16.mxu0 0
  %529 = vmatpush2.bf16.msra.mxu0 0
  %530 = vmatprep.subr.bf16.mxu0 0
  %531 = vmatpush2.bf16.msra.mxu0 0
  %532 = vmatprep.subr.bf16.mxu0 0
  %533 = vmatpush2.bf16.msra.mxu0 0
  %534 = vmatprep.subr.bf16.mxu0 0
  %535 = vmatpush2.bf16.msra.mxu0 0
  %536 = vmatprep.subr.bf16.mxu0 0
  %537 = vmatpush2.bf16.msra.mxu0 0
  %538 = vmatprep.mubr.bf16.mxu0 0
  %539 = vmatmul.mubr.bf16.gmra.mxu0 %v504
  %v540 = vpop.f32.mrf.mxu0
  %v541 = vadd.f32 %v494, %v540
  %v542 = vpop.f32.mrf.mxu0
  %v543 = vpop.f32.mrf.mxu0
  %v544 = vpop.f32.mrf.mxu0
  %545 = vdwg.mxu0
  %v546 = vxor.u32 %v541, 2147483648
  %v547 = vmul.f32 %v546, 1.442695
  %v548 = vpow.pop %v547
  %v549 = vadd.f32 %v548, 1.0
  %v550 = vrcp.pop %v549
  %v551 = vmul.f32 1.0, %v550
  %v552 = vtanh.pop %v541
  %v553 = vmul.f32 %v551, %v381
  %555 = vrot.lane.b32.xlu0 %v552, 64
  %v556 = vpop.permute.xlu0 %555
  %v558 = vmul.f32 %v551, %v556
  %560 = vrot.lane.b32.xlu0 %v558, 32
  %v561 = vpop.permute.xlu0 %560
  %v563 = vadd.f32 %v553, %v561
  %v564 = vtanh.pop %v563
  %566 = vrot.lane.b32.xlu0 %v564, 64
  %v567 = vpop.permute.xlu0 %566
  %v569 = vmul.f32 %v551, %v567
  %570 = vmatprep.subr.bf16.mxu0 0
  %571 = vmatpush1.bf16.msra.mxu0 0
  %572 = vmatprep.subr.bf16.mxu0 0
  %573 = vmatpush1.bf16.msra.mxu0 0
  %574 = vmatprep.subr.bf16.mxu0 0
  %575 = vmatpush1.bf16.msra.mxu0 0
  %576 = vmatprep.subr.bf16.mxu0 0
  %577 = vmatpush1.bf16.msra.mxu0 0
  %578 = vmatprep.subr.bf16.mxu0 0
  %579 = vmatpush1.bf16.msra.mxu0 0
  %580 = vmatprep.subr.bf16.mxu0 0
  %581 = vmatpush1.bf16.msra.mxu0 0
  %582 = vmatprep.subr.bf16.mxu0 0
  %583 = vmatpush1.bf16.msra.mxu0 %v182
  %584 = vmatprep.subr.bf16.mxu0 0
  %585 = vmatpush1.bf16.msra.mxu0 %v181
  %586 = vmatprep.subr.bf16.mxu0 0
  %587 = vmatpush2.bf16.msra.mxu0 0
  %588 = vmatprep.subr.bf16.mxu0 0
  %589 = vmatpush2.bf16.msra.mxu0 0
  %590 = vmatprep.subr.bf16.mxu0 0
  %591 = vmatpush2.bf16.msra.mxu0 0
  %592 = vmatprep.subr.bf16.mxu0 0
  %593 = vmatpush2.bf16.msra.mxu0 0
  %594 = vmatprep.subr.bf16.mxu0 0
  %595 = vmatpush2.bf16.msra.mxu0 0
  %596 = vmatprep.subr.bf16.mxu0 0
  %597 = vmatpush2.bf16.msra.mxu0 0
  %598 = vmatprep.subr.bf16.mxu0 0
  %599 = vmatpush2.bf16.msra.mxu0 0
  %600 = vmatprep.subr.bf16.mxu0 0
  %601 = vmatpush2.bf16.msra.mxu0 0
  %602 = vmatprep.mubr.bf16.mxu0 0
  %603 = vmatmul.mubr.bf16.gmra.mxu0 %v457
  %v604 = vpop.f32.mrf.mxu0
  %v605 = vadd.f32 %v151, %v604
  %v606 = vpop.f32.mrf.mxu0
  %v607 = vpop.f32.mrf.mxu0
  %v608 = vpop.f32.mrf.mxu0
  %609 = vdwg.mxu0
  %v610 = vxor.u32 %v605, 2147483648
  %v611 = vmul.f32 %v610, 1.442695
  %v612 = vpow.pop %v611
  %v613 = vadd.f32 %v612, 1.0
  %v614 = vrcp.pop %v613
  %v615 = vmul.f32 1.0, %v614
  %v616 = vtanh.pop %v605
  %v617 = vmul.f32 %v615, %v445
  %619 = vrot.lane.b32.xlu0 %v616, 64
  %v620 = vpop.permute.xlu0 %619
  %v622 = vmul.f32 %v615, %v620
  %624 = vrot.lane.b32.xlu0 %v622, 32
  %v625 = vpop.permute.xlu0 %624
  %v627 = vadd.f32 %v617, %v625
  %v628 = vtanh.pop %v627
  %630 = vrot.lane.b32.xlu0 %v628, 64
  %v631 = vpop.permute.xlu0 %630
  %v633 = vmul.f32 %v615, %v631
  %v634 = vpack.c.bf16 %v633, %v633
  %636 = vrot.lane.b32.xlu0 %v634, 32
  %v637 = vpop.permute.xlu0 %636
  %v639 = vsel %vm185, %v637, 0
  %641 = vmatprep.subr.bf16.mxu0 0
  %642 = vmatpush1.bf16.msra.mxu0 0
  %643 = vmatprep.subr.bf16.mxu0 0
  %644 = vmatpush1.bf16.msra.mxu0 0
  %645 = vmatprep.subr.bf16.mxu0 0
  %646 = vmatpush1.bf16.msra.mxu0 0
  %647 = vmatprep.subr.bf16.mxu0 0
  %648 = vmatpush1.bf16.msra.mxu0 0
  %649 = vmatprep.subr.bf16.mxu0 0
  %650 = vmatpush1.bf16.msra.mxu0 0
  %651 = vmatprep.subr.bf16.mxu0 0
  %652 = vmatpush1.bf16.msra.mxu0 0
  %653 = vmatprep.subr.bf16.mxu0 0
  %654 = vmatpush1.bf16.msra.mxu0 %v266
  %655 = vmatprep.subr.bf16.mxu0 0
  %656 = vmatpush1.bf16.msra.mxu0 %v265
  %657 = vmatprep.subr.bf16.mxu0 0
  %658 = vmatpush2.bf16.msra.mxu0 0
  %659 = vmatprep.subr.bf16.mxu0 0
  %660 = vmatpush2.bf16.msra.mxu0 0
  %661 = vmatprep.subr.bf16.mxu0 0
  %662 = vmatpush2.bf16.msra.mxu0 0
  %663 = vmatprep.subr.bf16.mxu0 0
  %664 = vmatpush2.bf16.msra.mxu0 0
  %665 = vmatprep.subr.bf16.mxu0 0
  %666 = vmatpush2.bf16.msra.mxu0 0
  %667 = vmatprep.subr.bf16.mxu0 0
  %668 = vmatpush2.bf16.msra.mxu0 0
  %669 = vmatprep.subr.bf16.mxu0 0
  %670 = vmatpush2.bf16.msra.mxu0 0
  %671 = vmatprep.subr.bf16.mxu0 0
  %672 = vmatpush2.bf16.msra.mxu0 0
  %673 = vmatprep.mubr.bf16.mxu0 0
  %674 = vmatmul.mubr.bf16.gmra.mxu0 %v639
  %v675 = vpop.f32.mrf.mxu0
  %v676 = vadd.f32 %v53, %v675
  %v677 = vpop.f32.mrf.mxu0
  %v678 = vpop.f32.mrf.mxu0
  %v679 = vpop.f32.mrf.mxu0
  %680 = vdwg.mxu0
  %v681 = vpack.c.bf16 %v569, %v569
  %683 = vrot.lane.b32.xlu0 %v681, 32
  %v684 = vpop.permute.xlu0 %683
  %v686 = vsel %vm185, %v684, 0
  %688 = vmatprep.subr.bf16.mxu0 0
  %689 = vmatpush1.bf16.msra.mxu0 0
  %690 = vmatprep.subr.bf16.mxu0 0
  %691 = vmatpush1.bf16.msra.mxu0 0
  %692 = vmatprep.subr.bf16.mxu0 0
  %693 = vmatpush1.bf16.msra.mxu0 0
  %694 = vmatprep.subr.bf16.mxu0 0
  %695 = vmatpush1.bf16.msra.mxu0 0
  %696 = vmatprep.subr.bf16.mxu0 0
  %697 = vmatpush1.bf16.msra.mxu0 0
  %698 = vmatprep.subr.bf16.mxu0 0
  %699 = vmatpush1.bf16.msra.mxu0 0
  %700 = vmatprep.subr.bf16.mxu0 0
  %701 = vmatpush1.bf16.msra.mxu0 %v321
  %702 = vmatprep.subr.bf16.mxu0 0
  %703 = vmatpush1.bf16.msra.mxu0 %v320
  %704 = vmatprep.subr.bf16.mxu0 0
  %705 = vmatpush2.bf16.msra.mxu0 0
  %706 = vmatprep.subr.bf16.mxu0 0
  %707 = vmatpush2.bf16.msra.mxu0 0
  %708 = vmatprep.subr.bf16.mxu0 0
  %709 = vmatpush2.bf16.msra.mxu0 0
  %710 = vmatprep.subr.bf16.mxu0 0
  %711 = vmatpush2.bf16.msra.mxu0 0
  %712 = vmatprep.subr.bf16.mxu0 0
  %713 = vmatpush2.bf16.msra.mxu0 0
  %714 = vmatprep.subr.bf16.mxu0 0
  %715 = vmatpush2.bf16.msra.mxu0 0
  %716 = vmatprep.subr.bf16.mxu0 0
  %717 = vmatpush2.bf16.msra.mxu0 0
  %718 = vmatprep.subr.bf16.mxu0 0
  %719 = vmatpush2.bf16.msra.mxu0 0
  %720 = vmatprep.mubr.bf16.mxu0 0
  %721 = vmatmul.mubr.bf16.gmra.mxu0 %v686
  %v722 = vpop.f32.mrf.mxu0
  %v723 = vadd.f32 %v676, %v722
  %v724 = vpop.f32.mrf.mxu0
  %v725 = vpop.f32.mrf.mxu0
  %v726 = vpop.f32.mrf.mxu0
  %727 = vdwg.mxu0
  %v728 = vxor.u32 %v723, 2147483648
  %v729 = vmul.f32 %v728, 1.442695
  %v730 = vpow.pop %v729
  %v731 = vadd.f32 %v730, 1.0
  %v732 = vrcp.pop %v731
  %v733 = vmul.f32 1.0, %v732
  %v734 = vtanh.pop %v723
  %v735 = vmul.f32 %v733, %v563
  %737 = vrot.lane.b32.xlu0 %v734, 64
  %v738 = vpop.permute.xlu0 %737
  %v740 = vmul.f32 %v733, %v738
  %742 = vrot.lane.b32.xlu0 %v740, 32
  %v743 = vpop.permute.xlu0 %742
  %v745 = vadd.f32 %v735, %v743
  %v746 = vtanh.pop %v745
  %748 = vrot.lane.b32.xlu0 %v746, 64
  %v749 = vpop.permute.xlu0 %748
  %v751 = vmul.f32 %v733, %v749
  %752 = vmatprep.subr.bf16.mxu0 0
  %753 = vmatpush1.bf16.msra.mxu0 0
  %754 = vmatprep.subr.bf16.mxu0 0
  %755 = vmatpush1.bf16.msra.mxu0 0
  %756 = vmatprep.subr.bf16.mxu0 0
  %757 = vmatpush1.bf16.msra.mxu0 0
  %758 = vmatprep.subr.bf16.mxu0 0
  %759 = vmatpush1.bf16.msra.mxu0 0
  %760 = vmatprep.subr.bf16.mxu0 0
  %761 = vmatpush1.bf16.msra.mxu0 0
  %762 = vmatprep.subr.bf16.mxu0 0
  %763 = vmatpush1.bf16.msra.mxu0 0
  %764 = vmatprep.subr.bf16.mxu0 0
  %765 = vmatpush1.bf16.msra.mxu0 %v182
  %766 = vmatprep.subr.bf16.mxu0 0
  %767 = vmatpush1.bf16.msra.mxu0 %v181
  %768 = vmatprep.subr.bf16.mxu0 0
  %769 = vmatpush2.bf16.msra.mxu0 0
  %770 = vmatprep.subr.bf16.mxu0 0
  %771 = vmatpush2.bf16.msra.mxu0 0
  %772 = vmatprep.subr.bf16.mxu0 0
  %773 = vmatpush2.bf16.msra.mxu0 0
  %774 = vmatprep.subr.bf16.mxu0 0
  %775 = vmatpush2.bf16.msra.mxu0 0
  %776 = vmatprep.subr.bf16.mxu0 0
  %777 = vmatpush2.bf16.msra.mxu0 0
  %778 = vmatprep.subr.bf16.mxu0 0
  %779 = vmatpush2.bf16.msra.mxu0 0
  %780 = vmatprep.subr.bf16.mxu0 0
  %781 = vmatpush2.bf16.msra.mxu0 0
  %782 = vmatprep.subr.bf16.mxu0 0
  %783 = vmatpush2.bf16.msra.mxu0 0
  %784 = vmatprep.mubr.bf16.mxu0 0
  %785 = vmatmul.mubr.bf16.gmra.mxu0 %v639
  %v786 = vpop.f32.mrf.mxu0
  %v787 = vadd.f32 %v154, %v786
  %v788 = vpop.f32.mrf.mxu0
  %v789 = vpop.f32.mrf.mxu0
  %v790 = vpop.f32.mrf.mxu0
  %791 = vdwg.mxu0
  %v792 = vxor.u32 %v787, 2147483648
  %v793 = vmul.f32 %v792, 1.442695
  %v794 = vpow.pop %v793
  %v795 = vadd.f32 %v794, 1.0
  %v796 = vrcp.pop %v795
  %v797 = vmul.f32 1.0, %v796
  %v798 = vtanh.pop %v787
  %v799 = vmul.f32 %v797, %v627
  %801 = vrot.lane.b32.xlu0 %v798, 64
  %v802 = vpop.permute.xlu0 %801
  %v804 = vmul.f32 %v797, %v802
  %806 = vrot.lane.b32.xlu0 %v804, 32
  %v807 = vpop.permute.xlu0 %806
  %v809 = vadd.f32 %v799, %v807
  %v810 = vtanh.pop %v809
  %812 = vrot.lane.b32.xlu0 %v810, 64
  %v813 = vpop.permute.xlu0 %812
  %v815 = vmul.f32 %v797, %v813
  %v816 = vpack.c.bf16 %v815, %v815
  %818 = vrot.lane.b32.xlu0 %v816, 32
  %v819 = vpop.permute.xlu0 %818
  %v821 = vsel %vm185, %v819, 0
  %823 = vmatprep.subr.bf16.mxu0 0
  %824 = vmatpush1.bf16.msra.mxu0 0
  %825 = vmatprep.subr.bf16.mxu0 0
  %826 = vmatpush1.bf16.msra.mxu0 0
  %827 = vmatprep.subr.bf16.mxu0 0
  %828 = vmatpush1.bf16.msra.mxu0 0
  %829 = vmatprep.subr.bf16.mxu0 0
  %830 = vmatpush1.bf16.msra.mxu0 0
  %831 = vmatprep.subr.bf16.mxu0 0
  %832 = vmatpush1.bf16.msra.mxu0 0
  %833 = vmatprep.subr.bf16.mxu0 0
  %834 = vmatpush1.bf16.msra.mxu0 0
  %835 = vmatprep.subr.bf16.mxu0 0
  %836 = vmatpush1.bf16.msra.mxu0 %v266
  %837 = vmatprep.subr.bf16.mxu0 0
  %838 = vmatpush1.bf16.msra.mxu0 %v265
  %839 = vmatprep.subr.bf16.mxu0 0
  %840 = vmatpush2.bf16.msra.mxu0 0
  %841 = vmatprep.subr.bf16.mxu0 0
  %842 = vmatpush2.bf16.msra.mxu0 0
  %843 = vmatprep.subr.bf16.mxu0 0
  %844 = vmatpush2.bf16.msra.mxu0 0
  %845 = vmatprep.subr.bf16.mxu0 0
  %846 = vmatpush2.bf16.msra.mxu0 0
  %847 = vmatprep.subr.bf16.mxu0 0
  %848 = vmatpush2.bf16.msra.mxu0 0
  %849 = vmatprep.subr.bf16.mxu0 0
  %850 = vmatpush2.bf16.msra.mxu0 0
  %851 = vmatprep.subr.bf16.mxu0 0
  %852 = vmatpush2.bf16.msra.mxu0 0
  %853 = vmatprep.subr.bf16.mxu0 0
  %854 = vmatpush2.bf16.msra.mxu0 0
  %855 = vmatprep.mubr.bf16.mxu0 0
  %856 = vmatmul.mubr.bf16.gmra.mxu0 %v821
  %v857 = vpop.f32.mrf.mxu0
  %v858 = vadd.f32 %v53, %v857
  %v859 = vpop.f32.mrf.mxu0
  %v860 = vpop.f32.mrf.mxu0
  %v861 = vpop.f32.mrf.mxu0
  %862 = vdwg.mxu0
  %v863 = vpack.c.bf16 %v751, %v751
  %865 = vrot.lane.b32.xlu0 %v863, 32
  %v866 = vpop.permute.xlu0 %865
  %v868 = vsel %vm185, %v866, 0
  %870 = vmatprep.subr.bf16.mxu0 0
  %871 = vmatpush1.bf16.msra.mxu0 0
  %872 = vmatprep.subr.bf16.mxu0 0
  %873 = vmatpush1.bf16.msra.mxu0 0
  %874 = vmatprep.subr.bf16.mxu0 0
  %875 = vmatpush1.bf16.msra.mxu0 0
  %876 = vmatprep.subr.bf16.mxu0 0
  %877 = vmatpush1.bf16.msra.mxu0 0
  %878 = vmatprep.subr.bf16.mxu0 0
  %879 = vmatpush1.bf16.msra.mxu0 0
  %880 = vmatprep.subr.bf16.mxu0 0
  %881 = vmatpush1.bf16.msra.mxu0 0
  %882 = vmatprep.subr.bf16.mxu0 0
  %883 = vmatpush1.bf16.msra.mxu0 %v321
  %884 = vmatprep.subr.bf16.mxu0 0
  %885 = vmatpush1.bf16.msra.mxu0 %v320
  %886 = vmatprep.subr.bf16.mxu0 0
  %887 = vmatpush2.bf16.msra.mxu0 0
  %888 = vmatprep.subr.bf16.mxu0 0
  %889 = vmatpush2.bf16.msra.mxu0 0
  %890 = vmatprep.subr.bf16.mxu0 0
  %891 = vmatpush2.bf16.msra.mxu0 0
  %892 = vmatprep.subr.bf16.mxu0 0
  %893 = vmatpush2.bf16.msra.mxu0 0
  %894 = vmatprep.subr.bf16.mxu0 0
  %895 = vmatpush2.bf16.msra.mxu0 0
  %896 = vmatprep.subr.bf16.mxu0 0
  %897 = vmatpush2.bf16.msra.mxu0 0
  %898 = vmatprep.subr.bf16.mxu0 0
  %899 = vmatpush2.bf16.msra.mxu0 0
  %900 = vmatprep.subr.bf16.mxu0 0
  %901 = vmatpush2.bf16.msra.mxu0 0
  %902 = vmatprep.mubr.bf16.mxu0 0
  %903 = vmatmul.mubr.bf16.gmra.mxu0 %v868
  %v904 = vpop.f32.mrf.mxu0
  %v905 = vadd.f32 %v858, %v904
  %v906 = vpop.f32.mrf.mxu0
  %v907 = vpop.f32.mrf.mxu0
  %v908 = vpop.f32.mrf.mxu0
  %909 = vdwg.mxu0
  %v910 = vxor.u32 %v905, 2147483648
  %v911 = vmul.f32 %v910, 1.442695
  %v912 = vpow.pop %v911
  %v913 = vadd.f32 %v912, 1.0
  %v914 = vrcp.pop %v913
  %v915 = vmul.f32 1.0, %v914
  %v916 = vtanh.pop %v905
  %v917 = vmul.f32 %v915, %v745
  %919 = vrot.lane.b32.xlu0 %v916, 64
  %v920 = vpop.permute.xlu0 %919
  %v922 = vmul.f32 %v915, %v920
  %924 = vrot.lane.b32.xlu0 %v922, 32
  %v925 = vpop.permute.xlu0 %924
  %v927 = vadd.f32 %v917, %v925
  %v928 = vtanh.pop %v927
  %930 = vrot.lane.b32.xlu0 %v928, 64
  %v931 = vpop.permute.xlu0 %930
  %v933 = vmul.f32 %v915, %v931
  %934 = vmatprep.subr.bf16.mxu0 0
  %935 = vmatpush1.bf16.msra.mxu0 0
  %936 = vmatprep.subr.bf16.mxu0 0
  %937 = vmatpush1.bf16.msra.mxu0 0
  %938 = vmatprep.subr.bf16.mxu0 0
  %939 = vmatpush1.bf16.msra.mxu0 0
  %940 = vmatprep.subr.bf16.mxu0 0
  %941 = vmatpush1.bf16.msra.mxu0 0
  %942 = vmatprep.subr.bf16.mxu0 0
  %943 = vmatpush1.bf16.msra.mxu0 0
  %944 = vmatprep.subr.bf16.mxu0 0
  %945 = vmatpush1.bf16.msra.mxu0 0
  %946 = vmatprep.subr.bf16.mxu0 0
  %947 = vmatpush1.bf16.msra.mxu0 %v182
  %948 = vmatprep.subr.bf16.mxu0 0
  %949 = vmatpush1.bf16.msra.mxu0 %v181
  %950 = vmatprep.subr.bf16.mxu0 0
  %951 = vmatpush2.bf16.msra.mxu0 0
  %952 = vmatprep.subr.bf16.mxu0 0
  %953 = vmatpush2.bf16.msra.mxu0 0
  %954 = vmatprep.subr.bf16.mxu0 0
  %955 = vmatpush2.bf16.msra.mxu0 0
  %956 = vmatprep.subr.bf16.mxu0 0
  %957 = vmatpush2.bf16.msra.mxu0 0
  %958 = vmatprep.subr.bf16.mxu0 0
  %959 = vmatpush2.bf16.msra.mxu0 0
  %960 = vmatprep.subr.bf16.mxu0 0
  %961 = vmatpush2.bf16.msra.mxu0 0
  %962 = vmatprep.subr.bf16.mxu0 0
  %963 = vmatpush2.bf16.msra.mxu0 0
  %964 = vmatprep.subr.bf16.mxu0 0
  %965 = vmatpush2.bf16.msra.mxu0 0
  %966 = vmatprep.mubr.bf16.mxu0 0
  %967 = vmatmul.mubr.bf16.gmra.mxu0 %v821
  %v968 = vpop.f32.mrf.mxu0
  %v969 = vadd.f32 %v159, %v968
  %v970 = vpop.f32.mrf.mxu0
  %v971 = vpop.f32.mrf.mxu0
  %v972 = vpop.f32.mrf.mxu0
  %973 = vdwg.mxu0
  %v974 = vxor.u32 %v969, 2147483648
  %v975 = vmul.f32 %v974, 1.442695
  %v976 = vpow.pop %v975
  %v977 = vadd.f32 %v976, 1.0
  %v978 = vrcp.pop %v977
  %v979 = vmul.f32 1.0, %v978
  %v980 = vtanh.pop %v969
  %v981 = vmul.f32 %v979, %v809
  %983 = vrot.lane.b32.xlu0 %v980, 64
  %v984 = vpop.permute.xlu0 %983
  %v986 = vmul.f32 %v979, %v984
  %988 = vrot.lane.b32.xlu0 %v986, 32
  %v989 = vpop.permute.xlu0 %988
  %v991 = vadd.f32 %v981, %v989
  %v992 = vtanh.pop %v991
  %994 = vrot.lane.b32.xlu0 %v992, 64
  %v995 = vpop.permute.xlu0 %994
  %v997 = vmul.f32 %v979, %v995
  %v998 = vpack.c.bf16 %v997, %v997
  %1000 = vrot.lane.b32.xlu0 %v998, 32
  %v1001 = vpop.permute.xlu0 %1000
  %v1003 = vsel %vm185, %v1001, 0
  %1005 = vmatprep.subr.bf16.mxu0 0
  %1006 = vmatpush1.bf16.msra.mxu0 0
  %1007 = vmatprep.subr.bf16.mxu0 0
  %1008 = vmatpush1.bf16.msra.mxu0 0
  %1009 = vmatprep.subr.bf16.mxu0 0
  %1010 = vmatpush1.bf16.msra.mxu0 0
  %1011 = vmatprep.subr.bf16.mxu0 0
  %1012 = vmatpush1.bf16.msra.mxu0 0
  %1013 = vmatprep.subr.bf16.mxu0 0
  %1014 = vmatpush1.bf16.msra.mxu0 0
  %1015 = vmatprep.subr.bf16.mxu0 0
  %1016 = vmatpush1.bf16.msra.mxu0 0
  %1017 = vmatprep.subr.bf16.mxu0 0
  %1018 = vmatpush1.bf16.msra.mxu0 %v266
  %1019 = vmatprep.subr.bf16.mxu0 0
  %1020 = vmatpush1.bf16.msra.mxu0 %v265
  %1021 = vmatprep.subr.bf16.mxu0 0
  %1022 = vmatpush2.bf16.msra.mxu0 0
  %1023 = vmatprep.subr.bf16.mxu0 0
  %1024 = vmatpush2.bf16.msra.mxu0 0
  %1025 = vmatprep.subr.bf16.mxu0 0
  %1026 = vmatpush2.bf16.msra.mxu0 0
  %1027 = vmatprep.subr.bf16.mxu0 0
  %1028 = vmatpush2.bf16.msra.mxu0 0
  %1029 = vmatprep.subr.bf16.mxu0 0
  %1030 = vmatpush2.bf16.msra.mxu0 0
  %1031 = vmatprep.subr.bf16.mxu0 0
  %1032 = vmatpush2.bf16.msra.mxu0 0
  %1033 = vmatprep.subr.bf16.mxu0 0
  %1034 = vmatpush2.bf16.msra.mxu0 0
  %1035 = vmatprep.subr.bf16.mxu0 0
  %1036 = vmatpush2.bf16.msra.mxu0 0
  %1037 = vmatprep.mubr.bf16.mxu0 0
  %1038 = vmatmul.mubr.bf16.gmra.mxu0 %v1003
  %v1039 = vpop.f32.mrf.mxu0
  %v1040 = vadd.f32 %v53, %v1039
  %v1041 = vpop.f32.mrf.mxu0
  %v1042 = vpop.f32.mrf.mxu0
  %v1043 = vpop.f32.mrf.mxu0
  %1044 = vdwg.mxu0
  %v1045 = vpack.c.bf16 %v933, %v933
  %1047 = vrot.lane.b32.xlu0 %v1045, 32
  %v1048 = vpop.permute.xlu0 %1047
  %v1050 = vsel %vm185, %v1048, 0
  %1052 = vmatprep.subr.bf16.mxu0 0
  %1053 = vmatpush1.bf16.msra.mxu0 0
  %1054 = vmatprep.subr.bf16.mxu0 0
  %1055 = vmatpush1.bf16.msra.mxu0 0
  %1056 = vmatprep.subr.bf16.mxu0 0
  %1057 = vmatpush1.bf16.msra.mxu0 0
  %1058 = vmatprep.subr.bf16.mxu0 0
  %1059 = vmatpush1.bf16.msra.mxu0 0
  %1060 = vmatprep.subr.bf16.mxu0 0
  %1061 = vmatpush1.bf16.msra.mxu0 0
  %1062 = vmatprep.subr.bf16.mxu0 0
  %1063 = vmatpush1.bf16.msra.mxu0 0
  %1064 = vmatprep.subr.bf16.mxu0 0
  %1065 = vmatpush1.bf16.msra.mxu0 %v321
  %1066 = vmatprep.subr.bf16.mxu0 0
  %1067 = vmatpush1.bf16.msra.mxu0 %v320
  %1068 = vmatprep.subr.bf16.mxu0 0
  %1069 = vmatpush2.bf16.msra.mxu0 0
  %1070 = vmatprep.subr.bf16.mxu0 0
  %1071 = vmatpush2.bf16.msra.mxu0 0
  %1072 = vmatprep.subr.bf16.mxu0 0
  %1073 = vmatpush2.bf16.msra.mxu0 0
  %1074 = vmatprep.subr.bf16.mxu0 0
  %1075 = vmatpush2.bf16.msra.mxu0 0
  %1076 = vmatprep.subr.bf16.mxu0 0
  %1077 = vmatpush2.bf16.msra.mxu0 0
  %1078 = vmatprep.subr.bf16.mxu0 0
  %1079 = vmatpush2.bf16.msra.mxu0 0
  %1080 = vmatprep.subr.bf16.mxu0 0
  %1081 = vmatpush2.bf16.msra.mxu0 0
  %1082 = vmatprep.subr.bf16.mxu0 0
  %1083 = vmatpush2.bf16.msra.mxu0 0
  %1084 = vmatprep.mubr.bf16.mxu0 0
  %1085 = vmatmul.mubr.bf16.gmra.mxu0 %v1050
  %v1086 = vpop.f32.mrf.mxu0
  %v1087 = vadd.f32 %v1040, %v1086
  %v1088 = vpop.f32.mrf.mxu0
  %v1089 = vpop.f32.mrf.mxu0
  %v1090 = vpop.f32.mrf.mxu0
  %1091 = vdwg.mxu0
  %v1092 = vxor.u32 %v1087, 2147483648
  %v1093 = vmul.f32 %v1092, 1.442695
  %v1094 = vpow.pop %v1093
  %v1095 = vadd.f32 %v1094, 1.0
  %v1096 = vrcp.pop %v1095
  %v1097 = vmul.f32 1.0, %v1096
  %v1098 = vtanh.pop %v1087
  %v1099 = vmul.f32 %v1097, %v927
  %1101 = vrot.lane.b32.xlu0 %v1098, 64
  %v1102 = vpop.permute.xlu0 %1101
  %v1104 = vmul.f32 %v1097, %v1102
  %1106 = vrot.lane.b32.xlu0 %v1104, 32
  %v1107 = vpop.permute.xlu0 %1106
  %v1109 = vadd.f32 %v1099, %v1107
  %v1110 = vtanh.pop %v1109
  %1112 = vrot.lane.b32.xlu0 %v1110, 64
  %v1113 = vpop.permute.xlu0 %1112
  %v1115 = vmul.f32 %v1097, %v1113
  %1116 = vmatprep.subr.bf16.mxu0 0
  %1117 = vmatpush1.bf16.msra.mxu0 0
  %1118 = vmatprep.subr.bf16.mxu0 0
  %1119 = vmatpush1.bf16.msra.mxu0 0
  %1120 = vmatprep.subr.bf16.mxu0 0
  %1121 = vmatpush1.bf16.msra.mxu0 0
  %1122 = vmatprep.subr.bf16.mxu0 0
  %1123 = vmatpush1.bf16.msra.mxu0 0
  %1124 = vmatprep.subr.bf16.mxu0 0
  %1125 = vmatpush1.bf16.msra.mxu0 0
  %1126 = vmatprep.subr.bf16.mxu0 0
  %1127 = vmatpush1.bf16.msra.mxu0 0
  %1128 = vmatprep.subr.bf16.mxu0 0
  %1129 = vmatpush1.bf16.msra.mxu0 %v182
  %1130 = vmatprep.subr.bf16.mxu0 0
  %1131 = vmatpush1.bf16.msra.mxu0 %v181
  %1132 = vmatprep.subr.bf16.mxu0 0
  %1133 = vmatpush2.bf16.msra.mxu0 0
  %1134 = vmatprep.subr.bf16.mxu0 0
  %1135 = vmatpush2.bf16.msra.mxu0 0
  %1136 = vmatprep.subr.bf16.mxu0 0
  %1137 = vmatpush2.bf16.msra.mxu0 0
  %1138 = vmatprep.subr.bf16.mxu0 0
  %1139 = vmatpush2.bf16.msra.mxu0 0
  %1140 = vmatprep.subr.bf16.mxu0 0
  %1141 = vmatpush2.bf16.msra.mxu0 0
  %1142 = vmatprep.subr.bf16.mxu0 0
  %1143 = vmatpush2.bf16.msra.mxu0 0
  %1144 = vmatprep.subr.bf16.mxu0 0
  %1145 = vmatpush2.bf16.msra.mxu0 0
  %1146 = vmatprep.subr.bf16.mxu0 0
  %1147 = vmatpush2.bf16.msra.mxu0 0
  %1148 = vmatprep.mubr.bf16.mxu0 0
  %1149 = vmatmul.mubr.bf16.gmra.mxu0 %v1003
  %v1150 = vpop.f32.mrf.mxu0
  %v1151 = vadd.f32 %v162, %v1150
  %v1152 = vpop.f32.mrf.mxu0
  %v1153 = vpop.f32.mrf.mxu0
  %v1154 = vpop.f32.mrf.mxu0
  %1155 = vdwg.mxu0
  %v1156 = vxor.u32 %v1151, 2147483648
  %v1157 = vmul.f32 %v1156, 1.442695
  %v1158 = vpow.pop %v1157
  %v1159 = vadd.f32 %v1158, 1.0
  %v1160 = vrcp.pop %v1159
  %v1161 = vmul.f32 1.0, %v1160
  %v1162 = vtanh.pop %v1151
  %v1163 = vmul.f32 %v1161, %v991
  %1165 = vrot.lane.b32.xlu0 %v1162, 64
  %v1166 = vpop.permute.xlu0 %1165
  %v1168 = vmul.f32 %v1161, %v1166
  %1170 = vrot.lane.b32.xlu0 %v1168, 32
  %v1171 = vpop.permute.xlu0 %1170
  %v1173 = vadd.f32 %v1163, %v1171
  %v1174 = vtanh.pop %v1173
  %1176 = vrot.lane.b32.xlu0 %v1174, 64
  %v1177 = vpop.permute.xlu0 %1176
  %v1179 = vmul.f32 %v1161, %v1177
  %v1180 = vpack.c.bf16 %v1179, %v1179
  %1182 = vrot.lane.b32.xlu0 %v1180, 32
  %v1183 = vpop.permute.xlu0 %1182
  %v1185 = vsel %vm185, %v1183, 0
  %1187 = vmatprep.subr.bf16.mxu0 0
  %1188 = vmatpush1.bf16.msra.mxu0 0
  %1189 = vmatprep.subr.bf16.mxu0 0
  %1190 = vmatpush1.bf16.msra.mxu0 0
  %1191 = vmatprep.subr.bf16.mxu0 0
  %1192 = vmatpush1.bf16.msra.mxu0 0
  %1193 = vmatprep.subr.bf16.mxu0 0
  %1194 = vmatpush1.bf16.msra.mxu0 0
  %1195 = vmatprep.subr.bf16.mxu0 0
  %1196 = vmatpush1.bf16.msra.mxu0 0
  %1197 = vmatprep.subr.bf16.mxu0 0
  %1198 = vmatpush1.bf16.msra.mxu0 0
  %1199 = vmatprep.subr.bf16.mxu0 0
  %1200 = vmatpush1.bf16.msra.mxu0 %v266
  %1201 = vmatprep.subr.bf16.mxu0 0
  %1202 = vmatpush1.bf16.msra.mxu0 %v265
  %1203 = vmatprep.subr.bf16.mxu0 0
  %1204 = vmatpush2.bf16.msra.mxu0 0
  %1205 = vmatprep.subr.bf16.mxu0 0
  %1206 = vmatpush2.bf16.msra.mxu0 0
  %1207 = vmatprep.subr.bf16.mxu0 0
  %1208 = vmatpush2.bf16.msra.mxu0 0
  %1209 = vmatprep.subr.bf16.mxu0 0
  %1210 = vmatpush2.bf16.msra.mxu0 0
  %1211 = vmatprep.subr.bf16.mxu0 0
  %1212 = vmatpush2.bf16.msra.mxu0 0
  %1213 = vmatprep.subr.bf16.mxu0 0
  %1214 = vmatpush2.bf16.msra.mxu0 0
  %1215 = vmatprep.subr.bf16.mxu0 0
  %1216 = vmatpush2.bf16.msra.mxu0 0
  %1217 = vmatprep.subr.bf16.mxu0 0
  %1218 = vmatpush2.bf16.msra.mxu0 0
  %1219 = vmatprep.mubr.bf16.mxu0 0
  %1220 = vmatmul.mubr.bf16.gmra.mxu0 %v1185
  %v1221 = vpop.f32.mrf.mxu0
  %v1222 = vadd.f32 %v53, %v1221
  %v1223 = vpop.f32.mrf.mxu0
  %v1224 = vpop.f32.mrf.mxu0
  %v1225 = vpop.f32.mrf.mxu0
  %1226 = vdwg.mxu0
  %v1227 = vpack.c.bf16 %v1115, %v1115
  %1229 = vrot.lane.b32.xlu0 %v1227, 32
  %v1230 = vpop.permute.xlu0 %1229
  %v1232 = vsel %vm185, %v1230, 0
  %1234 = vmatprep.subr.bf16.mxu0 0
  %1235 = vmatpush1.bf16.msra.mxu0 0
  %1236 = vmatprep.subr.bf16.mxu0 0
  %1237 = vmatpush1.bf16.msra.mxu0 0
  %1238 = vmatprep.subr.bf16.mxu0 0
  %1239 = vmatpush1.bf16.msra.mxu0 0
  %1240 = vmatprep.subr.bf16.mxu0 0
  %1241 = vmatpush1.bf16.msra.mxu0 0
  %1242 = vmatprep.subr.bf16.mxu0 0
  %1243 = vmatpush1.bf16.msra.mxu0 0
  %1244 = vmatprep.subr.bf16.mxu0 0
  %1245 = vmatpush1.bf16.msra.mxu0 0
  %1246 = vmatprep.subr.bf16.mxu0 0
  %1247 = vmatpush1.bf16.msra.mxu0 %v321
  %1248 = vmatprep.subr.bf16.mxu0 0
  %1249 = vmatpush1.bf16.msra.mxu0 %v320
  %1250 = vmatprep.subr.bf16.mxu0 0
  %1251 = vmatpush2.bf16.msra.mxu0 0
  %1252 = vmatprep.subr.bf16.mxu0 0
  %1253 = vmatpush2.bf16.msra.mxu0 0
  %1254 = vmatprep.subr.bf16.mxu0 0
  %1255 = vmatpush2.bf16.msra.mxu0 0
  %1256 = vmatprep.subr.bf16.mxu0 0
  %1257 = vmatpush2.bf16.msra.mxu0 0
  %1258 = vmatprep.subr.bf16.mxu0 0
  %1259 = vmatpush2.bf16.msra.mxu0 0
  %1260 = vmatprep.subr.bf16.mxu0 0
  %1261 = vmatpush2.bf16.msra.mxu0 0
  %1262 = vmatprep.subr.bf16.mxu0 0
  %1263 = vmatpush2.bf16.msra.mxu0 0
  %1264 = vmatprep.subr.bf16.mxu0 0
  %1265 = vmatpush2.bf16.msra.mxu0 0
  %1266 = vmatprep.mubr.bf16.mxu0 0
  %1267 = vmatmul.mubr.bf16.gmra.mxu0 %v1232
  %v1268 = vpop.f32.mrf.mxu0
  %v1269 = vadd.f32 %v1222, %v1268
  %v1270 = vpop.f32.mrf.mxu0
  %v1271 = vpop.f32.mrf.mxu0
  %v1272 = vpop.f32.mrf.mxu0
  %1273 = vdwg.mxu0
  %v1274 = vxor.u32 %v1269, 2147483648
  %v1275 = vmul.f32 %v1274, 1.442695
  %v1276 = vpow.pop %v1275
  %v1277 = vadd.f32 %v1276, 1.0
  %v1278 = vrcp.pop %v1277
  %v1279 = vmul.f32 1.0, %v1278
  %v1280 = vtanh.pop %v1269
  %v1281 = vmul.f32 %v1279, %v1109
  %1283 = vrot.lane.b32.xlu0 %v1280, 64
  %v1284 = vpop.permute.xlu0 %1283
  %v1286 = vmul.f32 %v1279, %v1284
  %1288 = vrot.lane.b32.xlu0 %v1286, 32
  %v1289 = vpop.permute.xlu0 %1288
  %v1291 = vadd.f32 %v1281, %v1289
  %v1292 = vtanh.pop %v1291
  %1294 = vrot.lane.b32.xlu0 %v1292, 64
  %v1295 = vpop.permute.xlu0 %1294
  %v1297 = vmul.f32 %v1279, %v1295
  %1298 = vmatprep.subr.bf16.mxu0 0
  %1299 = vmatpush1.bf16.msra.mxu0 0
  %1300 = vmatprep.subr.bf16.mxu0 0
  %1301 = vmatpush1.bf16.msra.mxu0 0
  %1302 = vmatprep.subr.bf16.mxu0 0
  %1303 = vmatpush1.bf16.msra.mxu0 0
  %1304 = vmatprep.subr.bf16.mxu0 0
  %1305 = vmatpush1.bf16.msra.mxu0 0
  %1306 = vmatprep.subr.bf16.mxu0 0
  %1307 = vmatpush1.bf16.msra.mxu0 0
  %1308 = vmatprep.subr.bf16.mxu0 0
  %1309 = vmatpush1.bf16.msra.mxu0 0
  %1310 = vmatprep.subr.bf16.mxu0 0
  %1311 = vmatpush1.bf16.msra.mxu0 %v182
  %1312 = vmatprep.subr.bf16.mxu0 0
  %1313 = vmatpush1.bf16.msra.mxu0 %v181
  %1314 = vmatprep.subr.bf16.mxu0 0
  %1315 = vmatpush2.bf16.msra.mxu0 0
  %1316 = vmatprep.subr.bf16.mxu0 0
  %1317 = vmatpush2.bf16.msra.mxu0 0
  %1318 = vmatprep.subr.bf16.mxu0 0
  %1319 = vmatpush2.bf16.msra.mxu0 0
  %1320 = vmatprep.subr.bf16.mxu0 0
  %1321 = vmatpush2.bf16.msra.mxu0 0
  %1322 = vmatprep.subr.bf16.mxu0 0
  %1323 = vmatpush2.bf16.msra.mxu0 0
  %1324 = vmatprep.subr.bf16.mxu0 0
  %1325 = vmatpush2.bf16.msra.mxu0 0
  %1326 = vmatprep.subr.bf16.mxu0 0
  %1327 = vmatpush2.bf16.msra.mxu0 0
  %1328 = vmatprep.subr.bf16.mxu0 0
  %1329 = vmatpush2.bf16.msra.mxu0 0
  %1330 = vmatprep.mubr.bf16.mxu0 0
  %1331 = vmatmul.mubr.bf16.gmra.mxu0 %v1185
  %v1332 = vpop.f32.mrf.mxu0
  %v1333 = vadd.f32 %v167, %v1332
  %v1334 = vpop.f32.mrf.mxu0
  %v1335 = vpop.f32.mrf.mxu0
  %v1336 = vpop.f32.mrf.mxu0
  %1337 = vdwg.mxu0
  %v1338 = vxor.u32 %v1333, 2147483648
  %v1339 = vmul.f32 %v1338, 1.442695
  %v1340 = vpow.pop %v1339
  %v1341 = vadd.f32 %v1340, 1.0
  %v1342 = vrcp.pop %v1341
  %v1343 = vmul.f32 1.0, %v1342
  %v1344 = vtanh.pop %v1333
  %v1345 = vmul.f32 %v1343, %v1173
  %1347 = vrot.lane.b32.xlu0 %v1344, 64
  %v1348 = vpop.permute.xlu0 %1347
  %v1350 = vmul.f32 %v1343, %v1348
  %1352 = vrot.lane.b32.xlu0 %v1350, 32
  %v1353 = vpop.permute.xlu0 %1352
  %v1355 = vadd.f32 %v1345, %v1353
  %v1356 = vtanh.pop %v1355
  %1358 = vrot.lane.b32.xlu0 %v1356, 64
  %v1359 = vpop.permute.xlu0 %1358
  %v1361 = vmul.f32 %v1343, %v1359
  %v1362 = vpack.c.bf16 %v1361, %v1361
  %1364 = vrot.lane.b32.xlu0 %v1362, 32
  %v1365 = vpop.permute.xlu0 %1364
  %v1367 = vsel %vm185, %v1365, 0
  %1369 = vmatprep.subr.bf16.mxu0 0
  %1370 = vmatpush1.bf16.msra.mxu0 0
  %1371 = vmatprep.subr.bf16.mxu0 0
  %1372 = vmatpush1.bf16.msra.mxu0 0
  %1373 = vmatprep.subr.bf16.mxu0 0
  %1374 = vmatpush1.bf16.msra.mxu0 0
  %1375 = vmatprep.subr.bf16.mxu0 0
  %1376 = vmatpush1.bf16.msra.mxu0 0
  %1377 = vmatprep.subr.bf16.mxu0 0
  %1378 = vmatpush1.bf16.msra.mxu0 0
  %1379 = vmatprep.subr.bf16.mxu0 0
  %1380 = vmatpush1.bf16.msra.mxu0 0
  %1381 = vmatprep.subr.bf16.mxu0 0
  %1382 = vmatpush1.bf16.msra.mxu0 %v266
  %1383 = vmatprep.subr.bf16.mxu0 0
  %1384 = vmatpush1.bf16.msra.mxu0 %v265
  %1385 = vmatprep.subr.bf16.mxu0 0
  %1386 = vmatpush2.bf16.msra.mxu0 0
  %1387 = vmatprep.subr.bf16.mxu0 0
  %1388 = vmatpush2.bf16.msra.mxu0 0
  %1389 = vmatprep.subr.bf16.mxu0 0
  %1390 = vmatpush2.bf16.msra.mxu0 0
  %1391 = vmatprep.subr.bf16.mxu0 0
  %1392 = vmatpush2.bf16.msra.mxu0 0
  %1393 = vmatprep.subr.bf16.mxu0 0
  %1394 = vmatpush2.bf16.msra.mxu0 0
  %1395 = vmatprep.subr.bf16.mxu0 0
  %1396 = vmatpush2.bf16.msra.mxu0 0
  %1397 = vmatprep.subr.bf16.mxu0 0
  %1398 = vmatpush2.bf16.msra.mxu0 0
  %1399 = vmatprep.subr.bf16.mxu0 0
  %1400 = vmatpush2.bf16.msra.mxu0 0
  %1401 = vmatprep.mubr.bf16.mxu0 0
  %1402 = vmatmul.mubr.bf16.gmra.mxu0 %v1367
  %v1403 = vpop.f32.mrf.mxu0
  %v1404 = vadd.f32 %v53, %v1403
  %v1405 = vpop.f32.mrf.mxu0
  %v1406 = vpop.f32.mrf.mxu0
  %v1407 = vpop.f32.mrf.mxu0
  %1408 = vdwg.mxu0
  %v1409 = vpack.c.bf16 %v1297, %v1297
  %1411 = vrot.lane.b32.xlu0 %v1409, 32
  %v1412 = vpop.permute.xlu0 %1411
  %v1414 = vsel %vm185, %v1412, 0
  %1416 = vmatprep.subr.bf16.mxu0 0
  %1417 = vmatpush1.bf16.msra.mxu0 0
  %1418 = vmatprep.subr.bf16.mxu0 0
  %1419 = vmatpush1.bf16.msra.mxu0 0
  %1420 = vmatprep.subr.bf16.mxu0 0
  %1421 = vmatpush1.bf16.msra.mxu0 0
  %1422 = vmatprep.subr.bf16.mxu0 0
  %1423 = vmatpush1.bf16.msra.mxu0 0
  %1424 = vmatprep.subr.bf16.mxu0 0
  %1425 = vmatpush1.bf16.msra.mxu0 0
  %1426 = vmatprep.subr.bf16.mxu0 0
  %1427 = vmatpush1.bf16.msra.mxu0 0
  %1428 = vmatprep.subr.bf16.mxu0 0
  %1429 = vmatpush1.bf16.msra.mxu0 %v321
  %1430 = vmatprep.subr.bf16.mxu0 0
  %1431 = vmatpush1.bf16.msra.mxu0 %v320
  %1432 = vmatprep.subr.bf16.mxu0 0
  %1433 = vmatpush2.bf16.msra.mxu0 0
  %1434 = vmatprep.subr.bf16.mxu0 0
  %1435 = vmatpush2.bf16.msra.mxu0 0
  %1436 = vmatprep.subr.bf16.mxu0 0
  %1437 = vmatpush2.bf16.msra.mxu0 0
  %1438 = vmatprep.subr.bf16.mxu0 0
  %1439 = vmatpush2.bf16.msra.mxu0 0
  %1440 = vmatprep.subr.bf16.mxu0 0
  %1441 = vmatpush2.bf16.msra.mxu0 0
  %1442 = vmatprep.subr.bf16.mxu0 0
  %1443 = vmatpush2.bf16.msra.mxu0 0
  %1444 = vmatprep.subr.bf16.mxu0 0
  %1445 = vmatpush2.bf16.msra.mxu0 0
  %1446 = vmatprep.subr.bf16.mxu0 0
  %1447 = vmatpush2.bf16.msra.mxu0 0
  %1448 = vmatprep.mubr.bf16.mxu0 0
  %1449 = vmatmul.mubr.bf16.gmra.mxu0 %v1414
  %v1450 = vpop.f32.mrf.mxu0
  %v1451 = vadd.f32 %v1404, %v1450
  %v1452 = vpop.f32.mrf.mxu0
  %v1453 = vpop.f32.mrf.mxu0
  %v1454 = vpop.f32.mrf.mxu0
  %1455 = vdwg.mxu0
  %v1456 = vxor.u32 %v1451, 2147483648
  %v1457 = vmul.f32 %v1456, 1.442695
  %v1458 = vpow.pop %v1457
  %v1459 = vadd.f32 %v1458, 1.0
  %v1460 = vrcp.pop %v1459
  %v1461 = vmul.f32 1.0, %v1460
  %v1462 = vtanh.pop %v1451
  %v1463 = vmul.f32 %v1461, %v1291
  %1465 = vrot.lane.b32.xlu0 %v1462, 64
  %v1466 = vpop.permute.xlu0 %1465
  %v1468 = vmul.f32 %v1461, %v1466
  %1470 = vrot.lane.b32.xlu0 %v1468, 32
  %v1471 = vpop.permute.xlu0 %1470
  %v1473 = vadd.f32 %v1463, %v1471
  %v1474 = vtanh.pop %v1473
  %1476 = vrot.lane.b32.xlu0 %v1474, 64
  %v1477 = vpop.permute.xlu0 %1476
  %v1479 = vmul.f32 %v1461, %v1477
  %1480 = vmatprep.subr.bf16.mxu0 0
  %1481 = vmatpush1.bf16.msra.mxu0 0
  %1482 = vmatprep.subr.bf16.mxu0 0
  %1483 = vmatpush1.bf16.msra.mxu0 0
  %1484 = vmatprep.subr.bf16.mxu0 0
  %1485 = vmatpush1.bf16.msra.mxu0 0
  %1486 = vmatprep.subr.bf16.mxu0 0
  %1487 = vmatpush1.bf16.msra.mxu0 0
  %1488 = vmatprep.subr.bf16.mxu0 0
  %1489 = vmatpush1.bf16.msra.mxu0 0
  %1490 = vmatprep.subr.bf16.mxu0 0
  %1491 = vmatpush1.bf16.msra.mxu0 0
  %1492 = vmatprep.subr.bf16.mxu0 0
  %1493 = vmatpush1.bf16.msra.mxu0 %v182
  %1494 = vmatprep.subr.bf16.mxu0 0
  %1495 = vmatpush1.bf16.msra.mxu0 %v181
  %1496 = vmatprep.subr.bf16.mxu0 0
  %1497 = vmatpush2.bf16.msra.mxu0 0
  %1498 = vmatprep.subr.bf16.mxu0 0
  %1499 = vmatpush2.bf16.msra.mxu0 0
  %1500 = vmatprep.subr.bf16.mxu0 0
  %1501 = vmatpush2.bf16.msra.mxu0 0
  %1502 = vmatprep.subr.bf16.mxu0 0
  %1503 = vmatpush2.bf16.msra.mxu0 0
  %1504 = vmatprep.subr.bf16.mxu0 0
  %1505 = vmatpush2.bf16.msra.mxu0 0
  %1506 = vmatprep.subr.bf16.mxu0 0
  %1507 = vmatpush2.bf16.msra.mxu0 0
  %1508 = vmatprep.subr.bf16.mxu0 0
  %1509 = vmatpush2.bf16.msra.mxu0 0
  %1510 = vmatprep.subr.bf16.mxu0 0
  %1511 = vmatpush2.bf16.msra.mxu0 0
  %1512 = vmatprep.mubr.bf16.mxu0 0
  %1513 = vmatmul.mubr.bf16.gmra.mxu0 %v1367
  %v1514 = vpop.f32.mrf.mxu0
  %v1515 = vadd.f32 %v170, %v1514
  %v1516 = vpop.f32.mrf.mxu0
  %v1517 = vpop.f32.mrf.mxu0
  %v1518 = vpop.f32.mrf.mxu0
  %1519 = vdwg.mxu0
  %v1520 = vxor.u32 %v1515, 2147483648
  %v1521 = vmul.f32 %v1520, 1.442695
  %v1522 = vpow.pop %v1521
  %v1523 = vadd.f32 %v1522, 1.0
  %v1524 = vrcp.pop %v1523
  %v1525 = vmul.f32 1.0, %v1524
  %v1526 = vtanh.pop %v1515
  %v1527 = vmul.f32 %v1525, %v1355
  %1529 = vrot.lane.b32.xlu0 %v1526, 64
  %v1530 = vpop.permute.xlu0 %1529
  %v1532 = vmul.f32 %v1525, %v1530
  %1534 = vrot.lane.b32.xlu0 %v1532, 32
  %v1535 = vpop.permute.xlu0 %1534
  %v1537 = vadd.f32 %v1527, %v1535
  %v1538 = vtanh.pop %v1537
  %1540 = vrot.lane.b32.xlu0 %v1538, 64
  %v1541 = vpop.permute.xlu0 %1540
  %v1543 = vmul.f32 %v1525, %v1541
  %v1544 = vpack.c.bf16 %v1543, %v1543
  %1546 = vrot.lane.b32.xlu0 %v1544, 32
  %v1547 = vpop.permute.xlu0 %1546
  %v1549 = vsel %vm185, %v1547, 0
  %1551 = vmatprep.subr.bf16.mxu0 0
  %1552 = vmatpush1.bf16.msra.mxu0 0
  %1553 = vmatprep.subr.bf16.mxu0 0
  %1554 = vmatpush1.bf16.msra.mxu0 0
  %1555 = vmatprep.subr.bf16.mxu0 0
  %1556 = vmatpush1.bf16.msra.mxu0 0
  %1557 = vmatprep.subr.bf16.mxu0 0
  %1558 = vmatpush1.bf16.msra.mxu0 0
  %1559 = vmatprep.subr.bf16.mxu0 0
  %1560 = vmatpush1.bf16.msra.mxu0 0
  %1561 = vmatprep.subr.bf16.mxu0 0
  %1562 = vmatpush1.bf16.msra.mxu0 0
  %1563 = vmatprep.subr.bf16.mxu0 0
  %1564 = vmatpush1.bf16.msra.mxu0 %v266
  %1565 = vmatprep.subr.bf16.mxu0 0
  %1566 = vmatpush1.bf16.msra.mxu0 %v265
  %1567 = vmatprep.subr.bf16.mxu0 0
  %1568 = vmatpush2.bf16.msra.mxu0 0
  %1569 = vmatprep.subr.bf16.mxu0 0
  %1570 = vmatpush2.bf16.msra.mxu0 0
  %1571 = vmatprep.subr.bf16.mxu0 0
  %1572 = vmatpush2.bf16.msra.mxu0 0
  %1573 = vmatprep.subr.bf16.mxu0 0
  %1574 = vmatpush2.bf16.msra.mxu0 0
  %1575 = vmatprep.subr.bf16.mxu0 0
  %1576 = vmatpush2.bf16.msra.mxu0 0
  %1577 = vmatprep.subr.bf16.mxu0 0
  %1578 = vmatpush2.bf16.msra.mxu0 0
  %1579 = vmatprep.subr.bf16.mxu0 0
  %1580 = vmatpush2.bf16.msra.mxu0 0
  %1581 = vmatprep.subr.bf16.mxu0 0
  %1582 = vmatpush2.bf16.msra.mxu0 0
  %1583 = vmatprep.mubr.bf16.mxu0 0
  %1584 = vmatmul.mubr.bf16.gmra.mxu0 %v1549
  %v1585 = vpop.f32.mrf.mxu0
  %v1586 = vadd.f32 %v53, %v1585
  %v1587 = vpop.f32.mrf.mxu0
  %v1588 = vpop.f32.mrf.mxu0
  %v1589 = vpop.f32.mrf.mxu0
  %1590 = vdwg.mxu0
  %v1591 = vpack.c.bf16 %v1479, %v1479
  %1593 = vrot.lane.b32.xlu0 %v1591, 32
  %v1594 = vpop.permute.xlu0 %1593
  %v1596 = vsel %vm185, %v1594, 0
  %1598 = vmatprep.subr.bf16.mxu0 0
  %1599 = vmatpush1.bf16.msra.mxu0 0
  %1600 = vmatprep.subr.bf16.mxu0 0
  %1601 = vmatpush1.bf16.msra.mxu0 0
  %1602 = vmatprep.subr.bf16.mxu0 0
  %1603 = vmatpush1.bf16.msra.mxu0 0
  %1604 = vmatprep.subr.bf16.mxu0 0
  %1605 = vmatpush1.bf16.msra.mxu0 0
  %1606 = vmatprep.subr.bf16.mxu0 0
  %1607 = vmatpush1.bf16.msra.mxu0 0
  %1608 = vmatprep.subr.bf16.mxu0 0
  %1609 = vmatpush1.bf16.msra.mxu0 0
  %1610 = vmatprep.subr.bf16.mxu0 0
  %1611 = vmatpush1.bf16.msra.mxu0 %v321
  %1612 = vmatprep.subr.bf16.mxu0 0
  %1613 = vmatpush1.bf16.msra.mxu0 %v320
  %1614 = vmatprep.subr.bf16.mxu0 0
  %1615 = vmatpush2.bf16.msra.mxu0 0
  %1616 = vmatprep.subr.bf16.mxu0 0
  %1617 = vmatpush2.bf16.msra.mxu0 0
  %1618 = vmatprep.subr.bf16.mxu0 0
  %1619 = vmatpush2.bf16.msra.mxu0 0
  %1620 = vmatprep.subr.bf16.mxu0 0
  %1621 = vmatpush2.bf16.msra.mxu0 0
  %1622 = vmatprep.subr.bf16.mxu0 0
  %1623 = vmatpush2.bf16.msra.mxu0 0
  %1624 = vmatprep.subr.bf16.mxu0 0
  %1625 = vmatpush2.bf16.msra.mxu0 0
  %1626 = vmatprep.subr.bf16.mxu0 0
  %1627 = vmatpush2.bf16.msra.mxu0 0
  %1628 = vmatprep.subr.bf16.mxu0 0
  %1629 = vmatpush2.bf16.msra.mxu0 0
  %1630 = vmatprep.mubr.bf16.mxu0 0
  %1631 = vmatmul.mubr.bf16.gmra.mxu0 %v1596
  %v1632 = vpop.f32.mrf.mxu0
  %v1633 = vadd.f32 %v1586, %v1632
  %v1634 = vpop.f32.mrf.mxu0
  %v1635 = vpop.f32.mrf.mxu0
  %v1636 = vpop.f32.mrf.mxu0
  %1637 = vdwg.mxu0
  %v1638 = vxor.u32 %v1633, 2147483648
  %v1639 = vmul.f32 %v1638, 1.442695
  %v1640 = vpow.pop %v1639
  %v1641 = vadd.f32 %v1640, 1.0
  %v1642 = vrcp.pop %v1641
  %v1643 = vmul.f32 1.0, %v1642
  %v1644 = vtanh.pop %v1633
  %v1645 = vmul.f32 %v1643, %v1473
  %1647 = vrot.lane.b32.xlu0 %v1644, 64
  %v1648 = vpop.permute.xlu0 %1647
  %v1650 = vmul.f32 %v1643, %v1648
  %1652 = vrot.lane.b32.xlu0 %v1650, 32
  %v1653 = vpop.permute.xlu0 %1652
  %v1655 = vadd.f32 %v1645, %v1653
  %v1656 = vtanh.pop %v1655
  %1658 = vrot.lane.b32.xlu0 %v1656, 64
  %v1659 = vpop.permute.xlu0 %1658
  %v1661 = vmul.f32 %v1643, %v1659
  %v1662 = vpack.c.bf16 %v1661, %v1661
  %v1663 = vld [vmem:[%s7] sm:$0xf]
  %v1664 = vld [vmem:[%s7 + $0x4] sm:$0xf]
  %v1665 = vld [vmem:[%s7 + $0x8] sm:$0xf]
  %v1666 = vld [vmem:[%s7 + $0xc] sm:$0xf]
  %v1667 = vld [vmem:[%s8] sm:$0x1]
  %v1669 = vlaneseq
  %v1670 = vshrl.u32 %v1669, 7
  %v1671 = vsub.s32 0, %v1670
  %v1672 = vrot.slane %v1667, %v1671
  %1675 = vrot.lane.b32.xlu0 %v1662, 32
  %v1676 = vpop.permute.xlu0 %1675
  %v1681 = vunpack.c.l.b16 %v1663
  %v1682 = vunpack.c.l.b16 %v1664
  %v1683 = vunpack.c.l.b16 %v1665
  %v1684 = vunpack.c.l.b16 %v1666
  %v1685 = vpack.c.b16 %v1682, %v1681
  %v1686 = vpack.c.b16 %v1684, %v1683
  %v1690 = vsel %vm185, %v1676, 0
  %1692 = vmatprep.subr.bf16.mxu0 0
  %1693 = vmatpush1.bf16.msra.mxu0 0
  %1694 = vmatprep.subr.bf16.mxu0 0
  %1695 = vmatpush1.bf16.msra.mxu0 0
  %1696 = vmatprep.subr.bf16.mxu0 0
  %1697 = vmatpush1.bf16.msra.mxu0 0
  %1698 = vmatprep.subr.bf16.mxu0 0
  %1699 = vmatpush1.bf16.msra.mxu0 0
  %1700 = vmatprep.subr.bf16.mxu0 0
  %1701 = vmatpush1.bf16.msra.mxu0 0
  %1702 = vmatprep.subr.bf16.mxu0 0
  %1703 = vmatpush1.bf16.msra.mxu0 0
  %1704 = vmatprep.subr.bf16.mxu0 0
  %1705 = vmatpush1.bf16.msra.mxu0 %v1686
  %1706 = vmatprep.subr.bf16.mxu0 0
  %1707 = vmatpush1.bf16.msra.mxu0 %v1685
  %1708 = vmatprep.subr.bf16.mxu0 0
  %1709 = vmatpush2.bf16.msra.mxu0 0
  %1710 = vmatprep.subr.bf16.mxu0 0
  %1711 = vmatpush2.bf16.msra.mxu0 0
  %1712 = vmatprep.subr.bf16.mxu0 0
  %1713 = vmatpush2.bf16.msra.mxu0 0
  %1714 = vmatprep.subr.bf16.mxu0 0
  %1715 = vmatpush2.bf16.msra.mxu0 0
  %1716 = vmatprep.subr.bf16.mxu0 0
  %1717 = vmatpush2.bf16.msra.mxu0 0
  %1718 = vmatprep.subr.bf16.mxu0 0
  %1719 = vmatpush2.bf16.msra.mxu0 0
  %1720 = vmatprep.subr.bf16.mxu0 0
  %1721 = vmatpush2.bf16.msra.mxu0 0
  %1722 = vmatprep.subr.bf16.mxu0 0
  %1723 = vmatpush2.bf16.msra.mxu0 0
  %1724 = vmatprep.mubr.bf16.mxu0 0
  %1725 = vmatmul.mubr.bf16.gmra.mxu0 %v1690
  %v1726 = vpop.f32.mrf.mxu0
  %v1727 = vadd.f32 %v1672, %v1726
  %v1728 = vpop.f32.mrf.mxu0
  %v1729 = vpop.f32.mrf.mxu0
  %v1730 = vpop.f32.mrf.mxu0
  %1731 = vdwg.mxu0
  %vm1732 = vcmask 162816
  %1733 = vst.msk [vmem:[%s9] sm:$0xff] %vm1732, %v1727
  // Predicated region
  $region38: #{lstm_fc_forward.1} parent=0 // pred_check
    _
  $region39: #{lstm_fc_forward.1} parent=0 // pred_check_branch
    %1735 = sbr.rel (0) target = $region41
  $region40: #{lstm_fc_forward.1} parent=0 // pred_region
    _
  $region41: #{lstm_fc_forward.1} parent=0 // pred_fallthru
    _
  // Predicated region
  $region42: #{lstm_fc_forward.1} parent=0 // pred_check
    _
  $region43: #{lstm_fc_forward.1} parent=0 // pred_check_branch
    %1737 = sbr.rel (0) target = $region45
  $region44: #{lstm_fc_forward.1} parent=0 // pred_region
    _
  $region45: #{lstm_fc_forward.1} parent=0 // pred_fallthru
    _

</llo_original>
